<compile_context>
chip_gen: v5e
topology: v5e:2x2
jax: 0.10.0
libtpu: 0.0.40
codegen_flags: <defaults>
</compile_context>

<pallas_src>
import functools

import jax
import jax.numpy as jnp
from jax.experimental import pallas as pl
from jax.experimental.pallas import tpu as pltpu

IMG_FEAT = 2048   # resnet50 fc.in_features
TXT_FEAT = 768    # bert-base-uncased hidden_size
PROJ = 256        # projection size used by the module
LANE = 128        # TPU lane width


def _round_up(x, m):
    return (x + m - 1) // m * m


def _range_softmax(x, lane, lo, hi):
    """Softmax of f32 `x` restricted to lanes [lo, hi); exactly zero elsewhere."""
    mask = (lane >= lo) & (lane < hi)
    xm = jnp.where(mask, x, jnp.float32(-1e30))
    m = jnp.max(xm, axis=-1, keepdims=True)
    e = jnp.exp(xm - m)                                 # masked lanes underflow to 0
    denom = jnp.sum(e, axis=-1, keepdims=True)
    return e * pl.reciprocal(denom, approx=True)


def _head_kernel(ximg_ref, xtxt_ref,
                 wimg_ref, wtxt_ref, bcomb_ref,
                 wfused_ref, bfused_ref, w2bot_ref, w3bot_ref,
                 out_ref, *, c1, c2):
    # image_features = image_model.fc(resnet feat); text_features = text_fc(pooler)
    img = jnp.dot(ximg_ref[...], wimg_ref[...], preferred_element_type=jnp.float32)
    txt = jnp.dot(xtxt_ref[...], wtxt_ref[...], preferred_element_type=jnp.float32)
    # combined = concat([image_features, text_features], dim=1): boundary is
    # 256 lanes (2 vregs) so this concat is pure layout, no data movement.
    combined = jnp.concatenate([img, txt], axis=-1) + bcomb_ref[...]      # (TB, 512) f32
    comb_bf = combined.astype(jnp.bfloat16)

    # One fused N=CTP matmul for the combined-input part of all three levels.
    # Columns of Wfused are packed [l1 | l2 | l3 | pad], so `packed` already
    # has the final output layout.
    packed = jnp.dot(comb_bf, wfused_ref[...], preferred_element_type=jnp.float32)
    packed = packed + bfused_ref[...]

    lane = jax.lax.broadcasted_iota(jnp.int32, packed.shape, dimension=1)

    # level-1 softmax -> small correction matmul into the level-2 lanes
    s1 = _range_softmax(packed, lane, 0, c1)
    packed = packed + jnp.dot(s1.astype(jnp.bfloat16), w2bot_ref[...],
                              preferred_element_type=jnp.float32)
    # level-2 softmax (over the now-complete level-2 logits) -> level-3 lanes
    s2 = _range_softmax(packed, lane, c1, c1 + c2)
    packed = packed + jnp.dot(s2.astype(jnp.bfloat16), w3bot_ref[...],
                              preferred_element_type=jnp.float32)

    out_ref[...] = packed


def pack_head_params(p):
    """Pack/pad head weights for the fused, lane-packed kernel layout."""
    c1 = p["b1"].shape[-1]
    c2 = p["b2"].shape[-1]
    c3 = p["b3"].shape[-1]
    ct = c1 + c2 + c3
    ctp = _round_up(ct, LANE)
    f32, bf = jnp.float32, jnp.bfloat16

    # Fused combined-input weight: W1 | W2[:512] | W3[:512] placed at packed
    # lane offsets [0, c1, c1+c2).
    wf = jnp.zeros((2 * PROJ, ctp), f32)
    wf = wf.at[:, 0:c1].set(p["W1"])
    wf = wf.at[:, c1:c1 + c2].set(p["W2"][:2 * PROJ])
    wf = wf.at[:, c1 + c2:ct].set(p["W3"][:2 * PROJ])

    bfused = jnp.zeros((1, ctp), f32)
    bfused = bfused.at[:, 0:c1].set(p["b1"])
    bfused = bfused.at[:, c1:c1 + c2].set(p["b2"])
    bfused = bfused.at[:, c1 + c2:ct].set(p["b3"])

    # Softmax-correction weights inside the packed CTP x CTP square:
    #   rows [0,c1)       x cols [c1,c1+c2)   <- W2[512:]  (s1 -> level-2)
    #   rows [c1,c1+c2)   x cols [c1+c2,ct)   <- W3[512:]  (s2 -> level-3)
    w2b = jnp.zeros((ctp, ctp), f32).at[0:c1, c1:c1 + c2].set(p["W2"][2 * PROJ:])
    w3b = jnp.zeros((ctp, ctp), f32).at[c1:c1 + c2, c1 + c2:ct].set(p["W3"][2 * PROJ:])

    return {
        "Wimg": p["Wimg"].astype(bf),
        "Wtxt": p["Wtxt"].astype(bf),
        "bcomb": jnp.concatenate([p["bimg"], p["btxt"]], axis=-1),        # (1, 512) f32
        "Wfused": wf.astype(bf),
        "bfused": bfused,
        "W2bot": w2b.astype(bf),
        "W3bot": w3b.astype(bf),
        "c": (c1, c2, c3),
    }


def _pick_tb(batch):
    """Batch tile: prefer an exact divisor of `batch` (no padding), 16-row
    aligned, capped at 512 rows (double-buffered activations fit every
    generation's VMEM, incl. v7x 64 MiB), and >=2 tiles when feasible so the
    "parallel" batch axis can use both v7x TensorCores."""
    cap = 512
    if batch <= cap:
        if batch >= 32 and batch % 32 == 0:
            return batch // 2          # two tiles -> both cores busy, no padding
        return batch                   # single exact tile (block == full dim)
    best = 0
    for tb in range(16, cap + 1, 16):
        if batch % tb == 0:
            best = tb
    if best:
        return best
    return cap                         # rare fallback: small tail pad


def hierarchical_head(img_backbone_feat, text_pooler_out, pp):
    """Fused classifier head: batch-gridded, weights resident in VMEM."""
    B = img_backbone_feat.shape[0]
    c1, c2, c3 = pp["c"]
    ct = c1 + c2 + c3
    ctp = pp["bfused"].shape[-1]

    TB = _pick_tb(B)
    grid_b = pl.cdiv(B, TB)
    b_total = grid_b * TB

    if b_total != B:
        # Small-tail pad only (fuses with the bf16 cast below, so it is not an
        # extra HBM pass over the activations).
        # TODO(synk): handle the ragged last tile in-kernel to avoid even this.
        ximg = jnp.pad(img_backbone_feat, ((0, b_total - B), (0, 0)))
        xtxt = jnp.pad(text_pooler_out, ((0, b_total - B), (0, 0)))
    else:
        ximg, xtxt = img_backbone_feat, text_pooler_out
    ximg = ximg.astype(jnp.bfloat16)
    xtxt = xtxt.astype(jnp.bfloat16)

    kernel = functools.partial(_head_kernel, c1=c1, c2=c2)

    act_spec_img = pl.BlockSpec((TB, IMG_FEAT), lambda i: (i, 0))
    act_spec_txt = pl.BlockSpec((TB, TXT_FEAT), lambda i: (i, 0))
    # Weights / biases: constant index_map -> resident in VMEM across the grid.
    const = lambda shape: pl.BlockSpec(shape, lambda i: (0, 0))

    out_packed = pl.pallas_call(
        kernel,
        grid=(grid_b,),
        out_shape=jax.ShapeDtypeStruct((b_total, ctp), jnp.float32),
        in_specs=[
            act_spec_img,
            act_spec_txt,
            const((IMG_FEAT, PROJ)),
            const((TXT_FEAT, PROJ)),
            const((1, 2 * PROJ)),
            const((2 * PROJ, ctp)),
            const((1, ctp)),
            const((ctp, ctp)),
            const((ctp, ctp)),
        ],
        out_specs=pl.BlockSpec((TB, ctp), lambda i: (i, 0)),
        compiler_params=pltpu.CompilerParams(
            dimension_semantics=("parallel",),
            vmem_limit_bytes=40 * 1024 * 1024),
    )(ximg, xtxt,
      pp["Wimg"], pp["Wtxt"], pp["bcomb"],
      pp["Wfused"], pp["bfused"], pp["W2bot"], pp["W3bot"])

    out_packed = out_packed[:B]
    return (out_packed[:, 0:c1],
            out_packed[:, c1:c1 + c2],
            out_packed[:, c1 + c2:ct])


def forward(image, input_ids, attention_mask, p, pp):
    """Full forward, mirroring HierarchicalMultimodalClassifier.forward.
    `pp` is the pre-packed head-parameter dict (pack_head_params, hoisted)."""
    # TODO(synk): pretrained ResNet50 conv backbone is not reproduced; stand-in
    # is global-average-pool + fixed deterministic projection to 2048 features.
    pooled = jnp.mean(image.astype(jnp.float32), axis=(2, 3))          # (B, C)
    img_bb = jax.nn.relu(pooled @ p["img_backbone_proj"])              # (B, 2048)

    # TODO(synk): pretrained BERT encoder is not reproduced; stand-in is a
    # deterministic embedding lookup + mask-weighted mean + tanh "pooler".
    emb = p["tok_emb"][input_ids]                                      # (B, S, 768)
    m = attention_mask[..., None].astype(jnp.float32)
    pooler = jnp.tanh(jnp.sum(emb * m, axis=1)
                      / jnp.maximum(jnp.sum(m, axis=1), 1.0))          # (B, 768)

    return hierarchical_head(img_bb, pooler, pp)


def init_params(key, num_classes_level1, num_classes_level2, num_classes_level3,
                img_channels, vocab_size):
    """Deterministic synthetic parameters, stored as (in_features, out_features)."""
    ks = jax.random.split(key, 12)
    s = 0.02
    return {
        # stand-in backbones
        "img_backbone_proj": s * jax.random.normal(ks[0], (img_channels, IMG_FEAT), jnp.float32),
        "tok_emb":           s * jax.random.normal(ks[1], (vocab_size, TXT_FEAT), jnp.float32),
        # image_model.fc : Linear(2048, 256)
        "Wimg": s * jax.random.normal(ks[2], (IMG_FEAT, PROJ), jnp.float32),
        "bimg": s * jax.random.normal(ks[3], (1, PROJ), jnp.float32),
        # text_fc : Linear(768, 256)
        "Wtxt": s * jax.random.normal(ks[4], (TXT_FEAT, PROJ), jnp.float32),
        "btxt": s * jax.random.normal(ks[5], (1, PROJ), jnp.float32),
        # fc_level1 : Linear(512, C1)
        "W1": s * jax.random.normal(ks[6], (2 * PROJ, num_classes_level1), jnp.float32),
        "b1": s * jax.random.normal(ks[7], (1, num_classes_level1), jnp.float32),
        # fc_level2 : Linear(512 + C1, C2)
        "W2": s * jax.random.normal(ks[8], (2 * PROJ + num_classes_level1, num_classes_level2), jnp.float32),
        "b2": s * jax.random.normal(ks[9], (1, num_classes_level2), jnp.float32),
        # fc_level3 : Linear(512 + C2, C3)
        "W3": s * jax.random.normal(ks[10], (2 * PROJ + num_classes_level2, num_classes_level3), jnp.float32),
        "b3": s * jax.random.normal(ks[11], (1, num_classes_level3), jnp.float32),
    }


def _reference_head(img_bb, pooler, p):
    """Plain-JAX reference (original concat form) using the same bf16 casts."""
    bf, f32 = jnp.bfloat16, jnp.float32
    img = jnp.dot(img_bb.astype(bf), p["Wimg"].astype(bf),
                  preferred_element_type=f32) + p["bimg"]
    txt = jnp.dot(pooler.astype(bf), p["Wtxt"].astype(bf),
                  preferred_element_type=f32) + p["btxt"]
    comb = jnp.concatenate([img, txt], axis=1)
    comb_bf = comb.astype(bf)
    l1 = jnp.dot(comb_bf, p["W1"].astype(bf), preferred_element_type=f32) + p["b1"]
    s1 = jax.nn.softmax(l1, axis=1)
    l2 = jnp.dot(jnp.concatenate([comb_bf, s1.astype(bf)], axis=1),
                 p["W2"].astype(bf), preferred_element_type=f32) + p["b2"]
    s2 = jax.nn.softmax(l2, axis=1)
    l3 = jnp.dot(jnp.concatenate([comb_bf, s2.astype(bf)], axis=1),
                 p["W3"].astype(bf), preferred_element_type=f32) + p["b3"]
    return l1, l2, l3


if __name__ == "__main__":
    B, C, H, W = 2, 4, 16, 16     # image: NCHW
    S = 8                         # text sequence length
    VOCAB = 100
    C1, C2, C3 = 8, 16, 32        # hierarchical class counts

    key = jax.random.PRNGKey(0)
    k_img, k_ids, k_par = jax.random.split(key, 3)

    image = jax.random.normal(k_img, (B, C, H, W), jnp.float32)
    input_ids = jax.random.randint(k_ids, (B, S), 0, VOCAB, jnp.int32)
    attention_mask = jnp.ones((B, S), jnp.int32)

    params = init_params(k_par, C1, C2, C3, img_channels=C, vocab_size=VOCAB)
    packed_params = pack_head_params(params)   # hoisted: packed once, reused

    out1, out2, out3 = forward(image, input_ids, attention_mask, params, packed_params)
    jax.block_until_ready((out1, out2, out3))

    assert out1.shape == (B, C1) and out2.shape == (B, C2) and out3.shape == (B, C3)

    # verify the Pallas head against a plain-JAX concat-form reference
    pooled = jnp.mean(image, axis=(2, 3))
    img_bb = jax.nn.relu(pooled @ params["img_backbone_proj"])
    emb = params["tok_emb"][input_ids]
    m = attention_mask[..., None].astype(jnp.float32)
    pooler = jnp.tanh(jnp.sum(emb * m, axis=1) / jnp.maximum(jnp.sum(m, axis=1), 1.0))
    r1, r2, r3 = _reference_head(img_bb, pooler, params)
    assert jnp.allclose(out1, r1, atol=1e-3, rtol=1e-2)
    assert jnp.allclose(out2, r2, atol=1e-3, rtol=1e-2)
    assert jnp.allclose(out3, r3, atol=1e-3, rtol=1e-2)

    print("KERNEL_OK")
</pallas_src>

<mosaic_0001>
module attributes {stable_mosaic.version = 11 : i64} {
  func.func @_head_kernel(%arg0: i32, %arg1: memref<2x2048xbf16, #tpu.memory_space<vmem>>, %arg2: memref<2x768xbf16, #tpu.memory_space<vmem>>, %arg3: memref<2048x256xbf16, #tpu.memory_space<vmem>>, %arg4: memref<768x256xbf16, #tpu.memory_space<vmem>>, %arg5: memref<1x512xf32, #tpu.memory_space<vmem>>, %arg6: memref<512x128xbf16, #tpu.memory_space<vmem>>, %arg7: memref<1x128xf32, #tpu.memory_space<vmem>>, %arg8: memref<128x128xbf16, #tpu.memory_space<vmem>>, %arg9: memref<128x128xbf16, #tpu.memory_space<vmem>>, %arg10: memref<2x128xf32, #tpu.memory_space<vmem>>) attributes {dimension_semantics = [#tpu.dimension_semantics<parallel>], iteration_bounds = array<i64: 1>, scalar_prefetch = 0 : i64, scratch_operands = 0 : i64, tpu.core_type = #tpu.core_type<tc>, window_params = [{transform_indices = @transform_0, window_bounds = array<i64: 2, 2048>}, {transform_indices = @transform_1, window_bounds = array<i64: 2, 768>}, {pipeline_mode = #tpu.pipeline_mode<synchronous>, transform_indices = @transform_2, window_bounds = array<i64: 2048, 256>}, {pipeline_mode = #tpu.pipeline_mode<synchronous>, transform_indices = @transform_3, window_bounds = array<i64: 768, 256>}, {pipeline_mode = #tpu.pipeline_mode<synchronous>, transform_indices = @transform_4, window_bounds = array<i64: 1, 512>}, {pipeline_mode = #tpu.pipeline_mode<synchronous>, transform_indices = @transform_5, window_bounds = array<i64: 512, 128>}, {pipeline_mode = #tpu.pipeline_mode<synchronous>, transform_indices = @transform_6, window_bounds = array<i64: 1, 128>}, {pipeline_mode = #tpu.pipeline_mode<synchronous>, transform_indices = @transform_7, window_bounds = array<i64: 128, 128>}, {pipeline_mode = #tpu.pipeline_mode<synchronous>, transform_indices = @transform_8, window_bounds = array<i64: 128, 128>}, {transform_indices = @transform_9, window_bounds = array<i64: 2, 128>}]} {
    %c0 = arith.constant 0 : index
    %c0_0 = arith.constant 0 : index
    %0 = vector.load %arg1[%c0, %c0_0] : memref<2x2048xbf16, #tpu.memory_space<vmem>>, vector<2x2048xbf16>
    %c0_1 = arith.constant 0 : index
    %c0_2 = arith.constant 0 : index
    %1 = vector.load %arg3[%c0_1, %c0_2] : memref<2048x256xbf16, #tpu.memory_space<vmem>>, vector<2048x256xbf16>
    %cst = arith.constant dense<0.000000e+00> : vector<2x256xf32>
    %2 = tpu.matmul %0, %1, %cst {dimension_numbers = #tpu.dot_dimension_numbers<[1], [0], [0], [1], [0, 0, 1, 1], [], []>} : vector<2x2048xbf16>, vector<2048x256xbf16>, vector<2x256xf32> -> vector<2x256xf32>
    %c0_3 = arith.constant 0 : index
    %c0_4 = arith.constant 0 : index
    %3 = vector.load %arg2[%c0_3, %c0_4] : memref<2x768xbf16, #tpu.memory_space<vmem>>, vector<2x768xbf16>
    %c0_5 = arith.constant 0 : index
    %c0_6 = arith.constant 0 : index
    %4 = vector.load %arg4[%c0_5, %c0_6] : memref<768x256xbf16, #tpu.memory_space<vmem>>, vector<768x256xbf16>
    %cst_7 = arith.constant dense<0.000000e+00> : vector<2x256xf32>
    %5 = tpu.matmul %3, %4, %cst_7 {dimension_numbers = #tpu.dot_dimension_numbers<[1], [0], [0], [1], [0, 0, 1, 1], [], []>} : vector<2x768xbf16>, vector<768x256xbf16>, vector<2x256xf32> -> vector<2x256xf32>
    %6 = tpu.concatenate %2, %5 in 1 : vector<2x256xf32>, vector<2x256xf32> -> vector<2x512xf32>
    %c0_8 = arith.constant 0 : index
    %c0_9 = arith.constant 0 : index
    %7 = vector.load %arg5[%c0_8, %c0_9] : memref<1x512xf32, #tpu.memory_space<vmem>>, vector<1x512xf32>
    %8 = vector.broadcast %7 : vector<1x512xf32> to vector<2x512xf32>
    %9 = arith.addf %6, %8 : vector<2x512xf32>
    %10 = arith.truncf %9 : vector<2x512xf32> to vector<2x512xbf16>
    %c0_10 = arith.constant 0 : index
    %c0_11 = arith.constant 0 : index
    %11 = vector.load %arg6[%c0_10, %c0_11] : memref<512x128xbf16, #tpu.memory_space<vmem>>, vector<512x128xbf16>
    %cst_12 = arith.constant dense<0.000000e+00> : vector<2x128xf32>
    %12 = tpu.matmul %10, %11, %cst_12 {dimension_numbers = #tpu.dot_dimension_numbers<[1], [0], [0], [1], [0, 0, 1, 1], [], []>} : vector<2x512xbf16>, vector<512x128xbf16>, vector<2x128xf32> -> vector<2x128xf32>
    %c0_13 = arith.constant 0 : index
    %c0_14 = arith.constant 0 : index
    %13 = vector.load %arg7[%c0_13, %c0_14] : memref<1x128xf32, #tpu.memory_space<vmem>>, vector<1x128xf32>
    %14 = vector.broadcast %13 : vector<1x128xf32> to vector<2x128xf32>
    %15 = arith.addf %12, %14 : vector<2x128xf32>
    %16 = tpu.iota {dimensions = array<i32: 1>} : vector<2x128xi32>
    %c0_i32 = arith.constant 0 : i32
    %17 = vector.broadcast %c0_i32 : i32 to vector<2x128xi32>
    %18 = arith.cmpi sge, %16, %17 : vector<2x128xi32>
    %c8_i32 = arith.constant 8 : i32
    %19 = vector.broadcast %c8_i32 : i32 to vector<2x128xi32>
    %20 = arith.cmpi slt, %16, %19 : vector<2x128xi32>
    %21 = arith.andi %18, %20 : vector<2x128xi1>
    %cst_15 = arith.constant -1.000000e+30 : f32
    %22 = vector.broadcast %cst_15 : f32 to vector<2x128xf32>
    %23 = arith.select %21, %15, %22 : vector<2x128xi1>, vector<2x128xf32>
    %cst_16 = arith.constant dense<0xFF800000> : vector<2xf32>
    %24 = vector.multi_reduction <maximumf>, %23, %cst_16 [1] : vector<2x128xf32> to vector<2xf32>
    %25 = vector.shape_cast %24 : vector<2xf32> to vector<2x1xf32>
    %26 = vector.broadcast %25 : vector<2x1xf32> to vector<2x128xf32>
    %27 = arith.subf %23, %26 : vector<2x128xf32>
    %28 = math.exp %27 : vector<2x128xf32>
    %cst_17 = arith.constant dense<0.000000e+00> : vector<2xf32>
    %29 = vector.multi_reduction <add>, %28, %cst_17 [1] : vector<2x128xf32> to vector<2xf32>
    %30 = vector.shape_cast %29 : vector<2xf32> to vector<2x1xf32>
    %31 = tpu.reciprocal %30 {approx = true} : vector<2x1xf32> -> vector<2x1xf32>
    %32 = vector.broadcast %31 : vector<2x1xf32> to vector<2x128xf32>
    %33 = arith.mulf %28, %32 : vector<2x128xf32>
    %34 = arith.truncf %33 : vector<2x128xf32> to vector<2x128xbf16>
    %c0_18 = arith.constant 0 : index
    %c0_19 = arith.constant 0 : index
    %35 = vector.load %arg8[%c0_18, %c0_19] : memref<128x128xbf16, #tpu.memory_space<vmem>>, vector<128x128xbf16>
    %cst_20 = arith.constant dense<0.000000e+00> : vector<2x128xf32>
    %36 = tpu.matmul %34, %35, %cst_20 {dimension_numbers = #tpu.dot_dimension_numbers<[1], [0], [0], [1], [0, 0, 1, 1], [], []>} : vector<2x128xbf16>, vector<128x128xbf16>, vector<2x128xf32> -> vector<2x128xf32>
    %37 = arith.addf %15, %36 : vector<2x128xf32>
    %c8_i32_21 = arith.constant 8 : i32
    %38 = vector.broadcast %c8_i32_21 : i32 to vector<2x128xi32>
    %39 = arith.cmpi sge, %16, %38 : vector<2x128xi32>
    %c24_i32 = arith.constant 24 : i32
    %40 = vector.broadcast %c24_i32 : i32 to vector<2x128xi32>
    %41 = arith.cmpi slt, %16, %40 : vector<2x128xi32>
    %42 = arith.andi %39, %41 : vector<2x128xi1>
    %cst_22 = arith.constant -1.000000e+30 : f32
    %43 = vector.broadcast %cst_22 : f32 to vector<2x128xf32>
    %44 = arith.select %42, %37, %43 : vector<2x128xi1>, vector<2x128xf32>
    %cst_23 = arith.constant dense<0xFF800000> : vector<2xf32>
    %45 = vector.multi_reduction <maximumf>, %44, %cst_23 [1] : vector<2x128xf32> to vector<2xf32>
    %46 = vector.shape_cast %45 : vector<2xf32> to vector<2x1xf32>
    %47 = vector.broadcast %46 : vector<2x1xf32> to vector<2x128xf32>
    %48 = arith.subf %44, %47 : vector<2x128xf32>
    %49 = math.exp %48 : vector<2x128xf32>
    %cst_24 = arith.constant dense<0.000000e+00> : vector<2xf32>
    %50 = vector.multi_reduction <add>, %49, %cst_24 [1] : vector<2x128xf32> to vector<2xf32>
    %51 = vector.shape_cast %50 : vector<2xf32> to vector<2x1xf32>
    %52 = tpu.reciprocal %51 {approx = true} : vector<2x1xf32> -> vector<2x1xf32>
    %53 = vector.broadcast %52 : vector<2x1xf32> to vector<2x128xf32>
    %54 = arith.mulf %49, %53 : vector<2x128xf32>
    %55 = arith.truncf %54 : vector<2x128xf32> to vector<2x128xbf16>
    %c0_25 = arith.constant 0 : index
    %c0_26 = arith.constant 0 : index
    %56 = vector.load %arg9[%c0_25, %c0_26] : memref<128x128xbf16, #tpu.memory_space<vmem>>, vector<128x128xbf16>
    %cst_27 = arith.constant dense<0.000000e+00> : vector<2x128xf32>
    %57 = tpu.matmul %55, %56, %cst_27 {dimension_numbers = #tpu.dot_dimension_numbers<[1], [0], [0], [1], [0, 0, 1, 1], [], []>} : vector<2x128xbf16>, vector<128x128xbf16>, vector<2x128xf32> -> vector<2x128xf32>
    %58 = arith.addf %37, %57 : vector<2x128xf32>
    %c0_28 = arith.constant 0 : index
    %c0_29 = arith.constant 0 : index
    %59 = vector.load %arg10[%c0_28, %c0_29] : memref<2x128xf32, #tpu.memory_space<vmem>>, vector<2x128xf32>
    tpu.vector_store %arg10[%c0_28, %c0_29], %58 {strides = array<i32>} : memref<2x128xf32, #tpu.memory_space<vmem>>, vector<2x128xf32>,
    return
  }
  func.func @transform_0(%arg0: i32) -> (i32, i32) {
    %c0_i32 = arith.constant 0 : i32
    %c0_i32_0 = arith.constant 0 : i32
    return %arg0, %c0_i32 : i32, i32
  }
  func.func @transform_1(%arg0: i32) -> (i32, i32) {
    %c0_i32 = arith.constant 0 : i32
    %c0_i32_0 = arith.constant 0 : i32
    return %arg0, %c0_i32 : i32, i32
  }
  func.func @transform_2(%arg0: i32) -> (i32, i32) {
    %c0_i32 = arith.constant 0 : i32
    %c0_i32_0 = arith.constant 0 : i32
    %c0_i32_1 = arith.constant 0 : i32
    return %c0_i32, %c0_i32_0 : i32, i32
  }
  func.func @transform_3(%arg0: i32) -> (i32, i32) {
    %c0_i32 = arith.constant 0 : i32
    %c0_i32_0 = arith.constant 0 : i32
    %c0_i32_1 = arith.constant 0 : i32
    return %c0_i32, %c0_i32_0 : i32, i32
  }
  func.func @transform_4(%arg0: i32) -> (i32, i32) {
    %c0_i32 = arith.constant 0 : i32
    %c0_i32_0 = arith.constant 0 : i32
    %c0_i32_1 = arith.constant 0 : i32
    return %c0_i32, %c0_i32_0 : i32, i32
  }
  func.func @transform_5(%arg0: i32) -> (i32, i32) {
    %c0_i32 = arith.constant 0 : i32
    %c0_i32_0 = arith.constant 0 : i32
    %c0_i32_1 = arith.constant 0 : i32
    return %c0_i32, %c0_i32_0 : i32, i32
  }
  func.func @transform_6(%arg0: i32) -> (i32, i32) {
    %c0_i32 = arith.constant 0 : i32
    %c0_i32_0 = arith.constant 0 : i32
    %c0_i32_1 = arith.constant 0 : i32
    return %c0_i32, %c0_i32_0 : i32, i32
  }
  func.func @transform_7(%arg0: i32) -> (i32, i32) {
    %c0_i32 = arith.constant 0 : i32
    %c0_i32_0 = arith.constant 0 : i32
    %c0_i32_1 = arith.constant 0 : i32
    return %c0_i32, %c0_i32_0 : i32, i32
  }
  func.func @transform_8(%arg0: i32) -> (i32, i32) {
    %c0_i32 = arith.constant 0 : i32
    %c0_i32_0 = arith.constant 0 : i32
    %c0_i32_1 = arith.constant 0 : i32
    return %c0_i32, %c0_i32_0 : i32, i32
  }
  func.func @transform_9(%arg0: i32) -> (i32, i32) {
    %c0_i32 = arith.constant 0 : i32
    %c0_i32_0 = arith.constant 0 : i32
    return %arg0, %c0_i32 : i32, i32
  }
}

</mosaic_0001>

<llo_original>
// kernel: tpu_custom_call.1
$region0: #{tpu_custom_call.1}
  #allocation0 [shape = 'u32[]', space=smem, size = 0x4, offset = 0x4, fixed_abs, tag = 'smem constant byte address 0x4 - core index']
  #allocation1 [shape = 'u32[72,128]{1,0:T(1,128)}', space=vmem, size = 0x9000, scoped, tag = 'internal scratch']
  %s0 = inlined_call_operand.hbm [shape: bf16[2,2048], index: 0, kind: input, shape index: {}]
  %s1 = inlined_call_operand.hbm [shape: bf16[2,768], index: 1, kind: input, shape index: {}]
  %s2 = inlined_call_operand.hbm [shape: bf16[2048,256], index: 2, kind: input, shape index: {}]
  %s3 = inlined_call_operand.hbm [shape: bf16[768,256], index: 3, kind: input, shape index: {}]
  %s4 = inlined_call_operand.hbm [shape: f32[1,512], index: 4, kind: input, shape index: {}]
  %s5 = inlined_call_operand.hbm [shape: bf16[512,128], index: 5, kind: input, shape index: {}]
  %s6 = inlined_call_operand.vmem [shape: f32[1,128], index: 6, kind: input, shape index: {}]
  %s7 = inlined_call_operand.hbm [shape: bf16[128,128], index: 7, kind: input, shape index: {}]
  %s8 = inlined_call_operand.hbm [shape: bf16[128,128], index: 8, kind: input, shape index: {}]
  %s9 = inlined_call_operand.hbm [shape: f32[2,128], index: 9, kind: output, shape index: {}]
  %s10 = sld [smem:[#allocation0]]
  $region78: #{tpu_custom_call.1} parent=0
    _
  %s12 = ssub.s32 1, %s10
  %s13 = scalar_select 0, %s12, %s10
  $region1: #{tpu_custom_call.1} parent=0
    #allocation2 [shape = 'u8[8192]{0}', space=vmem, size = 0x2000, scoped, tag = 'input window, operand 0, single buffered']
    #allocation3 [shape = 's32[1]{0}', space=sflag, size = 0x4, scoped, tag = 'scoped memory for tpu_custom_call.1']
    #allocation4 [shape = 's32[1]{0}', space=sflag, size = 0x4, scoped, tag = 'scoped memory for tpu_custom_call.1']
    #allocation5 [shape = 'u8[3072]{0}', space=vmem, size = 0xc00, scoped, tag = 'input window, operand 1, single buffered']
    #allocation6 [shape = 's32[1]{0}', space=sflag, size = 0x4, scoped, tag = 'scoped memory for tpu_custom_call.1']
    #allocation7 [shape = 'u8[1048576]{0}', space=vmem, size = 0x100000, scoped, tag = 'input window, operand 2, single buffered']
    #allocation8 [shape = 'u8[393216]{0}', space=vmem, size = 0x60000, scoped, tag = 'input window, operand 3, single buffered']
    #allocation9 [shape = 's32[1]{0}', space=sflag, size = 0x4, scoped, tag = 'scoped memory for tpu_custom_call.1']
    #allocation10 [shape = 'u8[2048]{0}', space=vmem, size = 0x800, scoped, tag = 'input window, operand 4, single buffered']
    #allocation11 [shape = 'u8[131072]{0}', space=vmem, size = 0x20000, scoped, tag = 'input window, operand 5, single buffered']
    #allocation12 [shape = 's32[1]{0}', space=sflag, size = 0x4, scoped, tag = 'scoped memory for tpu_custom_call.1']
    #allocation13 [shape = 'u8[32768]{0}', space=vmem, size = 0x8000, scoped, tag = 'input window, operand 7, single buffered']
    #allocation14 [shape = 'u8[32768]{0}', space=vmem, size = 0x8000, scoped, tag = 'input window, operand 8, single buffered']
    #allocation15 [shape = 's32[1]{0}', space=sflag, size = 0x4, scoped, tag = 'scoped memory for tpu_custom_call.1']
    #allocation16 [shape = 'u8[1024]{0}', space=vmem, size = 0x400, scoped, tag = 'output window, operand 0, single buffered']
    %14 = vsyncpa [#allocation3], 0
    %15 = vsyncpa [#allocation6], 0
    %16 = vsyncpa [#allocation9], 0
    %17 = vsyncpa [#allocation12], 0
    %18 = vsyncpa [#allocation15], 0
    %19 = vsyncpa [#allocation4], 0
    // Predicated region
    $region2: #{tpu_custom_call.1} parent=1 // pred_check
      _
    $region3: #{tpu_custom_call.1} parent=1 // pred_check_branch
      %21 = sbr.rel (0) target = $region5
    $region4: #{tpu_custom_call.1} parent=1 // pred_region
      %23 = vsyncadd [#allocation3], 0
      %s25 = sshll.u32 %s0, 4
      %s26 = int_to_ptr.hbm [resolvable:$true] %s25
      %s27 = sshll.u32 [#allocation2], 4
      %s28 = int_to_ptr.vmem [resolvable:$true] %s27
      %30 = dma.hbm_to_vmem [thread:$0]  %s26, 256, %s28, [#allocation3]
    $region5: #{tpu_custom_call.1} parent=1 // pred_fallthru
      _
    // Predicated region
    $region6: #{tpu_custom_call.1} parent=1 // pred_check
      _
    $region7: #{tpu_custom_call.1} parent=1 // pred_check_branch
      %32 = sbr.rel (0) target = $region9
    $region8: #{tpu_custom_call.1} parent=1 // pred_region
      %34 = vsyncadd [#allocation6], 0
      %s36 = sshll.u32 %s1, 4
      %s37 = int_to_ptr.hbm [resolvable:$true] %s36
      %s38 = sshll.u32 [#allocation5], 4
      %s39 = int_to_ptr.vmem [resolvable:$true] %s38
      %41 = dma.hbm_to_vmem [thread:$0]  %s37, 96, %s39, [#allocation6]
    $region9: #{tpu_custom_call.1} parent=1 // pred_fallthru
      _
    // Predicated region
    $region10: #{tpu_custom_call.1} parent=1 // pred_check
      _
    $region11: #{tpu_custom_call.1} parent=1 // pred_check_branch
      %43 = sbr.rel (0) target = $region13
    $region12: #{tpu_custom_call.1} parent=1 // pred_region
      %45 = vsyncadd [#allocation6], 0
      %s46 = sshll.u32 %s2, 4
      %s47 = int_to_ptr.hbm [resolvable:$true] %s46
      %s48 = sshll.u32 [#allocation7], 4
      %s49 = int_to_ptr.vmem [resolvable:$true] %s48
      %54 = dma.hbm_to_vmem [thread:$0]  %s47, 32768, %s49, [#allocation6], 128, 128, 8
    $region13: #{tpu_custom_call.1} parent=1 // pred_fallthru
      _
    // Predicated region
    $region14: #{tpu_custom_call.1} parent=1 // pred_check
      _
    $region15: #{tpu_custom_call.1} parent=1 // pred_check_branch
      %56 = sbr.rel (0) target = $region17
    $region16: #{tpu_custom_call.1} parent=1 // pred_region
      %58 = vsyncadd [#allocation9], 0
      %s59 = sshll.u32 %s3, 4
      %s60 = int_to_ptr.hbm [resolvable:$true] %s59
      %s61 = sshll.u32 [#allocation8], 4
      %s62 = int_to_ptr.vmem [resolvable:$true] %s61
      %67 = dma.hbm_to_vmem [thread:$0]  %s60, 12288, %s62, [#allocation9], 128, 128, 8
    $region17: #{tpu_custom_call.1} parent=1 // pred_fallthru
      _
    // Predicated region
    $region18: #{tpu_custom_call.1} parent=1 // pred_check
      _
    $region19: #{tpu_custom_call.1} parent=1 // pred_check_branch
      %69 = sbr.rel (0) target = $region21
    $region20: #{tpu_custom_call.1} parent=1 // pred_region
      %71 = vsyncadd [#allocation9], 0
      %s73 = sshll.u32 %s4, 4
      %s74 = int_to_ptr.hbm [resolvable:$true] %s73
      %s75 = sshll.u32 [#allocation10], 4
      %s76 = int_to_ptr.vmem [resolvable:$true] %s75
      %78 = dma.hbm_to_vmem [thread:$0]  %s74, 64, %s76, [#allocation9]
    $region21: #{tpu_custom_call.1} parent=1 // pred_fallthru
      _
    // Predicated region
    $region22: #{tpu_custom_call.1} parent=1 // pred_check
      _
    $region23: #{tpu_custom_call.1} parent=1 // pred_check_branch
      %80 = sbr.rel (0) target = $region25
    $region24: #{tpu_custom_call.1} parent=1 // pred_region
      %82 = vsyncadd [#allocation12], 0
      %s83 = sshll.u32 %s5, 4
      %s84 = int_to_ptr.hbm [resolvable:$true] %s83
      %s85 = sshll.u32 [#allocation11], 4
      %s86 = int_to_ptr.vmem [resolvable:$true] %s85
      %91 = dma.hbm_to_vmem [thread:$0]  %s84, 4096, %s86, [#allocation12], 64, 64, 4
    $region25: #{tpu_custom_call.1} parent=1 // pred_fallthru
      _
    // Predicated region
    $region26: #{tpu_custom_call.1} parent=1 // pred_check
      _
    $region27: #{tpu_custom_call.1} parent=1 // pred_check_branch
      %93 = sbr.rel (0) target = $region29
    $region28: #{tpu_custom_call.1} parent=1 // pred_region
      _
    $region29: #{tpu_custom_call.1} parent=1 // pred_fallthru
      _
    // Predicated region
    $region30: #{tpu_custom_call.1} parent=1 // pred_check
      _
    $region31: #{tpu_custom_call.1} parent=1 // pred_check_branch
      %95 = sbr.rel (0) target = $region33
    $region32: #{tpu_custom_call.1} parent=1 // pred_region
      %97 = vsyncadd [#allocation12], 0
      %s98 = sshll.u32 %s7, 4
      %s99 = int_to_ptr.hbm [resolvable:$true] %s98
      %s100 = sshll.u32 [#allocation13], 4
      %s101 = int_to_ptr.vmem [resolvable:$true] %s100
      %106 = dma.hbm_to_vmem [thread:$0]  %s99, 1024, %s101, [#allocation12], 64, 64, 4
    $region33: #{tpu_custom_call.1} parent=1 // pred_fallthru
      _
    // Predicated region
    $region34: #{tpu_custom_call.1} parent=1 // pred_check
      _
    $region35: #{tpu_custom_call.1} parent=1 // pred_check_branch
      %108 = sbr.rel (0) target = $region37
    $region36: #{tpu_custom_call.1} parent=1 // pred_region
      %110 = vsyncadd [#allocation15], 0
      %s111 = sshll.u32 %s8, 4
      %s112 = int_to_ptr.hbm [resolvable:$true] %s111
      %s113 = sshll.u32 [#allocation14], 4
      %s114 = int_to_ptr.vmem [resolvable:$true] %s113
      %119 = dma.hbm_to_vmem [thread:$0]  %s112, 1024, %s114, [#allocation15], 64, 64, 4
    $region37: #{tpu_custom_call.1} parent=1 // pred_fallthru
      _
    // Predicated region
    $region38: #{tpu_custom_call.1} parent=1 // pred_check
      _
    $region39: #{tpu_custom_call.1} parent=1 // pred_check_branch
      %121 = sbr.rel (0) target = $region41
    $region40: #{tpu_custom_call.1} parent=1 // pred_region
      %123 = dma.done [#allocation3], 256
    $region41: #{tpu_custom_call.1} parent=1 // pred_fallthru
      _
    // Predicated region
    $region42: #{tpu_custom_call.1} parent=1 // pred_check
      _
    $region43: #{tpu_custom_call.1} parent=1 // pred_check_branch
      %125 = sbr.rel (0) target = $region45
    $region44: #{tpu_custom_call.1} parent=1 // pred_region
      %127 = dma.done [#allocation6], 96
    $region45: #{tpu_custom_call.1} parent=1 // pred_fallthru
      _
    // Predicated region
    $region46: #{tpu_custom_call.1} parent=1 // pred_check
      _
    $region47: #{tpu_custom_call.1} parent=1 // pred_check_branch
      %129 = sbr.rel (0) target = $region49
    $region48: #{tpu_custom_call.1} parent=1 // pred_region
      %131 = dma.done [#allocation6], 32768
    $region49: #{tpu_custom_call.1} parent=1 // pred_fallthru
      _
    // Predicated region
    $region50: #{tpu_custom_call.1} parent=1 // pred_check
      _
    $region51: #{tpu_custom_call.1} parent=1 // pred_check_branch
      %133 = sbr.rel (0) target = $region53
    $region52: #{tpu_custom_call.1} parent=1 // pred_region
      %135 = dma.done [#allocation9], 12288
    $region53: #{tpu_custom_call.1} parent=1 // pred_fallthru
      _
    // Predicated region
    $region54: #{tpu_custom_call.1} parent=1 // pred_check
      _
    $region55: #{tpu_custom_call.1} parent=1 // pred_check_branch
      %137 = sbr.rel (0) target = $region57
    $region56: #{tpu_custom_call.1} parent=1 // pred_region
      %139 = dma.done [#allocation9], 64
    $region57: #{tpu_custom_call.1} parent=1 // pred_fallthru
      _
    // Predicated region
    $region58: #{tpu_custom_call.1} parent=1 // pred_check
      _
    $region59: #{tpu_custom_call.1} parent=1 // pred_check_branch
      %141 = sbr.rel (0) target = $region61
    $region60: #{tpu_custom_call.1} parent=1 // pred_region
      %143 = dma.done [#allocation12], 4096
    $region61: #{tpu_custom_call.1} parent=1 // pred_fallthru
      _
    // Predicated region
    $region62: #{tpu_custom_call.1} parent=1 // pred_check
      _
    $region63: #{tpu_custom_call.1} parent=1 // pred_check_branch
      %145 = sbr.rel (0) target = $region65
    $region64: #{tpu_custom_call.1} parent=1 // pred_region
      %147 = dma.done [#allocation12], 1024
    $region65: #{tpu_custom_call.1} parent=1 // pred_fallthru
      _
    // Predicated region
    $region66: #{tpu_custom_call.1} parent=1 // pred_check
      _
    $region67: #{tpu_custom_call.1} parent=1 // pred_check_branch
      %149 = sbr.rel (0) target = $region69
    $region68: #{tpu_custom_call.1} parent=1 // pred_region
      %151 = dma.done [#allocation15], 1024
    $region69: #{tpu_custom_call.1} parent=1 // pred_fallthru
      _
    %v152 = vld [vmem:[#allocation2] sm:$0xff]
    %v153 = vld [vmem:[#allocation2 + $0x8] sm:$0xff]
    %v154 = vld [vmem:[#allocation7] sm:$0xff]
    %v155 = vld [vmem:[#allocation7 + $0x8] sm:$0xff]
    %v156 = vld [vmem:[#allocation7 + $0x10] sm:$0xff]
    %v157 = vld [vmem:[#allocation7 + $0x18] sm:$0xff]
    %v158 = vld [vmem:[#allocation7 + $0x20] sm:$0xff]
    %v159 = vld [vmem:[#allocation7 + $0x28] sm:$0xff]
    %v160 = vld [vmem:[#allocation7 + $0x30] sm:$0xff]
    %v161 = vld [vmem:[#allocation7 + $0x38] sm:$0xff]
    %v162 = vld [vmem:[#allocation7 + $0x40] sm:$0xff]
    %v163 = vld [vmem:[#allocation7 + $0x48] sm:$0xff]
    %v164 = vld [vmem:[#allocation7 + $0x50] sm:$0xff]
    %v165 = vld [vmem:[#allocation7 + $0x58] sm:$0xff]
    %v166 = vld [vmem:[#allocation7 + $0x60] sm:$0xff]
    %v167 = vld [vmem:[#allocation7 + $0x68] sm:$0xff]
    %v168 = vld [vmem:[#allocation7 + $0x70] sm:$0xff]
    %v169 = vld [vmem:[#allocation7 + $0x78] sm:$0xff]
    %v170 = vld [vmem:[#allocation7 + $0x80] sm:$0xff]
    %v171 = vld [vmem:[#allocation7 + $0x88] sm:$0xff]
    %v172 = vld [vmem:[#allocation7 + $0x90] sm:$0xff]
    %v173 = vld [vmem:[#allocation7 + $0x98] sm:$0xff]
    %v174 = vld [vmem:[#allocation7 + $0xa0] sm:$0xff]
    %v175 = vld [vmem:[#allocation7 + $0xa8] sm:$0xff]
    %v176 = vld [vmem:[#allocation7 + $0xb0] sm:$0xff]
    %v177 = vld [vmem:[#allocation7 + $0xb8] sm:$0xff]
    %v178 = vld [vmem:[#allocation7 + $0xc0] sm:$0xff]
    %v179 = vld [vmem:[#allocation7 + $0xc8] sm:$0xff]
    %v180 = vld [vmem:[#allocation7 + $0xd0] sm:$0xff]
    %v181 = vld [vmem:[#allocation7 + $0xd8] sm:$0xff]
    %v182 = vld [vmem:[#allocation7 + $0xe0] sm:$0xff]
    %v183 = vld [vmem:[#allocation7 + $0xe8] sm:$0xff]
    %v184 = vld [vmem:[#allocation7 + $0xf0] sm:$0xff]
    %v185 = vld [vmem:[#allocation7 + $0xf8] sm:$0xff]
    %v186 = vld [vmem:[#allocation7 + $0x100] sm:$0xff]
    %v187 = vld [vmem:[#allocation7 + $0x108] sm:$0xff]
    %v188 = vld [vmem:[#allocation7 + $0x110] sm:$0xff]
    %v189 = vld [vmem:[#allocation7 + $0x118] sm:$0xff]
    %v190 = vld [vmem:[#allocation7 + $0x120] sm:$0xff]
    %v191 = vld [vmem:[#allocation7 + $0x128] sm:$0xff]
    %v192 = vld [vmem:[#allocation7 + $0x130] sm:$0xff]
    %v193 = vld [vmem:[#allocation7 + $0x138] sm:$0xff]
    %v194 = vld [vmem:[#allocation7 + $0x140] sm:$0xff]
    %v195 = vld [vmem:[#allocation7 + $0x148] sm:$0xff]
    %v196 = vld [vmem:[#allocation7 + $0x150] sm:$0xff]
    %v197 = vld [vmem:[#allocation7 + $0x158] sm:$0xff]
    %v198 = vld [vmem:[#allocation7 + $0x160] sm:$0xff]
    %v199 = vld [vmem:[#allocation7 + $0x168] sm:$0xff]
    %v200 = vld [vmem:[#allocation7 + $0x170] sm:$0xff]
    %v201 = vld [vmem:[#allocation7 + $0x178] sm:$0xff]
    %v202 = vld [vmem:[#allocation7 + $0x180] sm:$0xff]
    %v203 = vld [vmem:[#allocation7 + $0x188] sm:$0xff]
    %v204 = vld [vmem:[#allocation7 + $0x190] sm:$0xff]
    %v205 = vld [vmem:[#allocation7 + $0x198] sm:$0xff]
    %v206 = vld [vmem:[#allocation7 + $0x1a0] sm:$0xff]
    %v207 = vld [vmem:[#allocation7 + $0x1a8] sm:$0xff]
    %v208 = vld [vmem:[#allocation7 + $0x1b0] sm:$0xff]
    %v209 = vld [vmem:[#allocation7 + $0x1b8] sm:$0xff]
    %v210 = vld [vmem:[#allocation7 + $0x1c0] sm:$0xff]
    %v211 = vld [vmem:[#allocation7 + $0x1c8] sm:$0xff]
    %v212 = vld [vmem:[#allocation7 + $0x1d0] sm:$0xff]
    %v213 = vld [vmem:[#allocation7 + $0x1d8] sm:$0xff]
    %v214 = vld [vmem:[#allocation7 + $0x1e0] sm:$0xff]
    %v215 = vld [vmem:[#allocation7 + $0x1e8] sm:$0xff]
    %v216 = vld [vmem:[#allocation7 + $0x1f0] sm:$0xff]
    %v217 = vld [vmem:[#allocation7 + $0x1f8] sm:$0xff]
    %v218 = vld [vmem:[#allocation7 + $0x200] sm:$0xff]
    %v219 = vld [vmem:[#allocation7 + $0x208] sm:$0xff]
    %v220 = vld [vmem:[#allocation7 + $0x210] sm:$0xff]
    %v221 = vld [vmem:[#allocation7 + $0x218] sm:$0xff]
    %v222 = vld [vmem:[#allocation7 + $0x220] sm:$0xff]
    %v223 = vld [vmem:[#allocation7 + $0x228] sm:$0xff]
    %v224 = vld [vmem:[#allocation7 + $0x230] sm:$0xff]
    %v225 = vld [vmem:[#allocation7 + $0x238] sm:$0xff]
    %v226 = vld [vmem:[#allocation7 + $0x240] sm:$0xff]
    %v227 = vld [vmem:[#allocation7 + $0x248] sm:$0xff]
    %v228 = vld [vmem:[#allocation7 + $0x250] sm:$0xff]
    %v229 = vld [vmem:[#allocation7 + $0x258] sm:$0xff]
    %v230 = vld [vmem:[#allocation7 + $0x260] sm:$0xff]
    %v231 = vld [vmem:[#allocation7 + $0x268] sm:$0xff]
    %v232 = vld [vmem:[#allocation7 + $0x270] sm:$0xff]
    %v233 = vld [vmem:[#allocation7 + $0x278] sm:$0xff]
    %v234 = vld [vmem:[#allocation7 + $0x280] sm:$0xff]
    %v235 = vld [vmem:[#allocation7 + $0x288] sm:$0xff]
    %v236 = vld [vmem:[#allocation7 + $0x290] sm:$0xff]
    %v237 = vld [vmem:[#allocation7 + $0x298] sm:$0xff]
    %v238 = vld [vmem:[#allocation7 + $0x2a0] sm:$0xff]
    %v239 = vld [vmem:[#allocation7 + $0x2a8] sm:$0xff]
    %v240 = vld [vmem:[#allocation7 + $0x2b0] sm:$0xff]
    %v241 = vld [vmem:[#allocation7 + $0x2b8] sm:$0xff]
    %v242 = vld [vmem:[#allocation7 + $0x2c0] sm:$0xff]
    %v243 = vld [vmem:[#allocation7 + $0x2c8] sm:$0xff]
    %v244 = vld [vmem:[#allocation7 + $0x2d0] sm:$0xff]
    %v245 = vld [vmem:[#allocation7 + $0x2d8] sm:$0xff]
    %v246 = vld [vmem:[#allocation7 + $0x2e0] sm:$0xff]
    %v247 = vld [vmem:[#allocation7 + $0x2e8] sm:$0xff]
    %v248 = vld [vmem:[#allocation7 + $0x2f0] sm:$0xff]
    %v249 = vld [vmem:[#allocation7 + $0x2f8] sm:$0xff]
    %v250 = vld [vmem:[#allocation7 + $0x300] sm:$0xff]
    %v251 = vld [vmem:[#allocation7 + $0x308] sm:$0xff]
    %v252 = vld [vmem:[#allocation7 + $0x310] sm:$0xff]
    %v253 = vld [vmem:[#allocation7 + $0x318] sm:$0xff]
    %v254 = vld [vmem:[#allocation7 + $0x320] sm:$0xff]
    %v255 = vld [vmem:[#allocation7 + $0x328] sm:$0xff]
    %v256 = vld [vmem:[#allocation7 + $0x330] sm:$0xff]
    %v257 = vld [vmem:[#allocation7 + $0x338] sm:$0xff]
    %v258 = vld [vmem:[#allocation7 + $0x340] sm:$0xff]
    %v259 = vld [vmem:[#allocation7 + $0x348] sm:$0xff]
    %v260 = vld [vmem:[#allocation7 + $0x350] sm:$0xff]
    %v261 = vld [vmem:[#allocation7 + $0x358] sm:$0xff]
    %v262 = vld [vmem:[#allocation7 + $0x360] sm:$0xff]
    %v263 = vld [vmem:[#allocation7 + $0x368] sm:$0xff]
    %v264 = vld [vmem:[#allocation7 + $0x370] sm:$0xff]
    %v265 = vld [vmem:[#allocation7 + $0x378] sm:$0xff]
    %v266 = vld [vmem:[#allocation7 + $0x380] sm:$0xff]
    %v267 = vld [vmem:[#allocation7 + $0x388] sm:$0xff]
    %v268 = vld [vmem:[#allocation7 + $0x390] sm:$0xff]
    %v269 = vld [vmem:[#allocation7 + $0x398] sm:$0xff]
    %v270 = vld [vmem:[#allocation7 + $0x3a0] sm:$0xff]
    %v271 = vld [vmem:[#allocation7 + $0x3a8] sm:$0xff]
    %v272 = vld [vmem:[#allocation7 + $0x3b0] sm:$0xff]
    %v273 = vld [vmem:[#allocation7 + $0x3b8] sm:$0xff]
    %v274 = vld [vmem:[#allocation7 + $0x3c0] sm:$0xff]
    %v275 = vld [vmem:[#allocation7 + $0x3c8] sm:$0xff]
    %v276 = vld [vmem:[#allocation7 + $0x3d0] sm:$0xff]
    %v277 = vld [vmem:[#allocation7 + $0x3d8] sm:$0xff]
    %v278 = vld [vmem:[#allocation7 + $0x3e0] sm:$0xff]
    %v279 = vld [vmem:[#allocation7 + $0x3e8] sm:$0xff]
    %v280 = vld [vmem:[#allocation7 + $0x3f0] sm:$0xff]
    %v281 = vld [vmem:[#allocation7 + $0x3f8] sm:$0xff]
    %v282 = vld [vmem:[#allocation7 + $0x400] sm:$0xff]
    %v283 = vld [vmem:[#allocation7 + $0x408] sm:$0xff]
    %v284 = vld [vmem:[#allocation7 + $0x410] sm:$0xff]
    %v285 = vld [vmem:[#allocation7 + $0x418] sm:$0xff]
    %v286 = vld [vmem:[#allocation7 + $0x420] sm:$0xff]
    %v287 = vld [vmem:[#allocation7 + $0x428] sm:$0xff]
    %v288 = vld [vmem:[#allocation7 + $0x430] sm:$0xff]
    %v289 = vld [vmem:[#allocation7 + $0x438] sm:$0xff]
    %v290 = vld [vmem:[#allocation7 + $0x440] sm:$0xff]
    %v291 = vld [vmem:[#allocation7 + $0x448] sm:$0xff]
    %v292 = vld [vmem:[#allocation7 + $0x450] sm:$0xff]
    %v293 = vld [vmem:[#allocation7 + $0x458] sm:$0xff]
    %v294 = vld [vmem:[#allocation7 + $0x460] sm:$0xff]
    %v295 = vld [vmem:[#allocation7 + $0x468] sm:$0xff]
    %v296 = vld [vmem:[#allocation7 + $0x470] sm:$0xff]
    %v297 = vld [vmem:[#allocation7 + $0x478] sm:$0xff]
    %v298 = vld [vmem:[#allocation7 + $0x480] sm:$0xff]
    %v299 = vld [vmem:[#allocation7 + $0x488] sm:$0xff]
    %v300 = vld [vmem:[#allocation7 + $0x490] sm:$0xff]
    %v301 = vld [vmem:[#allocation7 + $0x498] sm:$0xff]
    %v302 = vld [vmem:[#allocation7 + $0x4a0] sm:$0xff]
    %v303 = vld [vmem:[#allocation7 + $0x4a8] sm:$0xff]
    %v304 = vld [vmem:[#allocation7 + $0x4b0] sm:$0xff]
    %v305 = vld [vmem:[#allocation7 + $0x4b8] sm:$0xff]
    %v306 = vld [vmem:[#allocation7 + $0x4c0] sm:$0xff]
    %v307 = vld [vmem:[#allocation7 + $0x4c8] sm:$0xff]
    %v308 = vld [vmem:[#allocation7 + $0x4d0] sm:$0xff]
    %v309 = vld [vmem:[#allocation7 + $0x4d8] sm:$0xff]
    %v310 = vld [vmem:[#allocation7 + $0x4e0] sm:$0xff]
    %v311 = vld [vmem:[#allocation7 + $0x4e8] sm:$0xff]
    %v312 = vld [vmem:[#allocation7 + $0x4f0] sm:$0xff]
    %v313 = vld [vmem:[#allocation7 + $0x4f8] sm:$0xff]
    %v314 = vld [vmem:[#allocation7 + $0x500] sm:$0xff]
    %v315 = vld [vmem:[#allocation7 + $0x508] sm:$0xff]
    %v316 = vld [vmem:[#allocation7 + $0x510] sm:$0xff]
    %v317 = vld [vmem:[#allocation7 + $0x518] sm:$0xff]
    %v318 = vld [vmem:[#allocation7 + $0x520] sm:$0xff]
    %v319 = vld [vmem:[#allocation7 + $0x528] sm:$0xff]
    %v320 = vld [vmem:[#allocation7 + $0x530] sm:$0xff]
    %v321 = vld [vmem:[#allocation7 + $0x538] sm:$0xff]
    %v322 = vld [vmem:[#allocation7 + $0x540] sm:$0xff]
    %v323 = vld [vmem:[#allocation7 + $0x548] sm:$0xff]
    %v324 = vld [vmem:[#allocation7 + $0x550] sm:$0xff]
    %v325 = vld [vmem:[#allocation7 + $0x558] sm:$0xff]
    %v326 = vld [vmem:[#allocation7 + $0x560] sm:$0xff]
    %v327 = vld [vmem:[#allocation7 + $0x568] sm:$0xff]
    %v328 = vld [vmem:[#allocation7 + $0x570] sm:$0xff]
    %v329 = vld [vmem:[#allocation7 + $0x578] sm:$0xff]
    %v330 = vld [vmem:[#allocation7 + $0x580] sm:$0xff]
    %v331 = vld [vmem:[#allocation7 + $0x588] sm:$0xff]
    %v332 = vld [vmem:[#allocation7 + $0x590] sm:$0xff]
    %v333 = vld [vmem:[#allocation7 + $0x598] sm:$0xff]
    %v334 = vld [vmem:[#allocation7 + $0x5a0] sm:$0xff]
    %v335 = vld [vmem:[#allocation7 + $0x5a8] sm:$0xff]
    %v336 = vld [vmem:[#allocation7 + $0x5b0] sm:$0xff]
    %v337 = vld [vmem:[#allocation7 + $0x5b8] sm:$0xff]
    %v338 = vld [vmem:[#allocation7 + $0x5c0] sm:$0xff]
    %v339 = vld [vmem:[#allocation7 + $0x5c8] sm:$0xff]
    %v340 = vld [vmem:[#allocation7 + $0x5d0] sm:$0xff]
    %v341 = vld [vmem:[#allocation7 + $0x5d8] sm:$0xff]
    %v342 = vld [vmem:[#allocation7 + $0x5e0] sm:$0xff]
    %v343 = vld [vmem:[#allocation7 + $0x5e8] sm:$0xff]
    %v344 = vld [vmem:[#allocation7 + $0x5f0] sm:$0xff]
    %v345 = vld [vmem:[#allocation7 + $0x5f8] sm:$0xff]
    %v346 = vld [vmem:[#allocation7 + $0x600] sm:$0xff]
    %v347 = vld [vmem:[#allocation7 + $0x608] sm:$0xff]
    %v348 = vld [vmem:[#allocation7 + $0x610] sm:$0xff]
    %v349 = vld [vmem:[#allocation7 + $0x618] sm:$0xff]
    %v350 = vld [vmem:[#allocation7 + $0x620] sm:$0xff]
    %v351 = vld [vmem:[#allocation7 + $0x628] sm:$0xff]
    %v352 = vld [vmem:[#allocation7 + $0x630] sm:$0xff]
    %v353 = vld [vmem:[#allocation7 + $0x638] sm:$0xff]
    %v354 = vld [vmem:[#allocation7 + $0x640] sm:$0xff]
    %v355 = vld [vmem:[#allocation7 + $0x648] sm:$0xff]
    %v356 = vld [vmem:[#allocation7 + $0x650] sm:$0xff]
    %v357 = vld [vmem:[#allocation7 + $0x658] sm:$0xff]
    %v358 = vld [vmem:[#allocation7 + $0x660] sm:$0xff]
    %v359 = vld [vmem:[#allocation7 + $0x668] sm:$0xff]
    %v360 = vld [vmem:[#allocation7 + $0x670] sm:$0xff]
    %v361 = vld [vmem:[#allocation7 + $0x678] sm:$0xff]
    %v362 = vld [vmem:[#allocation7 + $0x680] sm:$0xff]
    %v363 = vld [vmem:[#allocation7 + $0x688] sm:$0xff]
    %v364 = vld [vmem:[#allocation7 + $0x690] sm:$0xff]
    %v365 = vld [vmem:[#allocation7 + $0x698] sm:$0xff]
    %v366 = vld [vmem:[#allocation7 + $0x6a0] sm:$0xff]
    %v367 = vld [vmem:[#allocation7 + $0x6a8] sm:$0xff]
    %v368 = vld [vmem:[#allocation7 + $0x6b0] sm:$0xff]
    %v369 = vld [vmem:[#allocation7 + $0x6b8] sm:$0xff]
    %v370 = vld [vmem:[#allocation7 + $0x6c0] sm:$0xff]
    %v371 = vld [vmem:[#allocation7 + $0x6c8] sm:$0xff]
    %v372 = vld [vmem:[#allocation7 + $0x6d0] sm:$0xff]
    %v373 = vld [vmem:[#allocation7 + $0x6d8] sm:$0xff]
    %v374 = vld [vmem:[#allocation7 + $0x6e0] sm:$0xff]
    %v375 = vld [vmem:[#allocation7 + $0x6e8] sm:$0xff]
    %v376 = vld [vmem:[#allocation7 + $0x6f0] sm:$0xff]
    %v377 = vld [vmem:[#allocation7 + $0x6f8] sm:$0xff]
    %v378 = vld [vmem:[#allocation7 + $0x700] sm:$0xff]
    %v379 = vld [vmem:[#allocation7 + $0x708] sm:$0xff]
    %v380 = vld [vmem:[#allocation7 + $0x710] sm:$0xff]
    %v381 = vld [vmem:[#allocation7 + $0x718] sm:$0xff]
    %v382 = vld [vmem:[#allocation7 + $0x720] sm:$0xff]
    %v383 = vld [vmem:[#allocation7 + $0x728] sm:$0xff]
    %v384 = vld [vmem:[#allocation7 + $0x730] sm:$0xff]
    %v385 = vld [vmem:[#allocation7 + $0x738] sm:$0xff]
    %v386 = vld [vmem:[#allocation7 + $0x740] sm:$0xff]
    %v387 = vld [vmem:[#allocation7 + $0x748] sm:$0xff]
    %v388 = vld [vmem:[#allocation7 + $0x750] sm:$0xff]
    %v389 = vld [vmem:[#allocation7 + $0x758] sm:$0xff]
    %v390 = vld [vmem:[#allocation7 + $0x760] sm:$0xff]
    %v391 = vld [vmem:[#allocation7 + $0x768] sm:$0xff]
    %v392 = vld [vmem:[#allocation7 + $0x770] sm:$0xff]
    %v393 = vld [vmem:[#allocation7 + $0x778] sm:$0xff]
    %v394 = vld [vmem:[#allocation7 + $0x780] sm:$0xff]
    %v395 = vld [vmem:[#allocation7 + $0x788] sm:$0xff]
    %v396 = vld [vmem:[#allocation7 + $0x790] sm:$0xff]
    %v397 = vld [vmem:[#allocation7 + $0x798] sm:$0xff]
    %v398 = vld [vmem:[#allocation7 + $0x7a0] sm:$0xff]
    %v399 = vld [vmem:[#allocation7 + $0x7a8] sm:$0xff]
    %v400 = vld [vmem:[#allocation7 + $0x7b0] sm:$0xff]
    %v401 = vld [vmem:[#allocation7 + $0x7b8] sm:$0xff]
    %v402 = vld [vmem:[#allocation7 + $0x7c0] sm:$0xff]
    %v403 = vld [vmem:[#allocation7 + $0x7c8] sm:$0xff]
    %v404 = vld [vmem:[#allocation7 + $0x7d0] sm:$0xff]
    %v405 = vld [vmem:[#allocation7 + $0x7d8] sm:$0xff]
    %v406 = vld [vmem:[#allocation7 + $0x7e0] sm:$0xff]
    %v407 = vld [vmem:[#allocation7 + $0x7e8] sm:$0xff]
    %v408 = vld [vmem:[#allocation7 + $0x7f0] sm:$0xff]
    %v409 = vld [vmem:[#allocation7 + $0x7f8] sm:$0xff]
    %411 = vst [vmem:[#allocation1] ss:$9 sm:$0xff] %v152
    %v412 = vld [vmem:[#allocation1] sm:$0xff]
    %v413 = vld [vmem:[#allocation1 + $0x9] sm:$0xff]
    %v414 = vld [vmem:[#allocation1 + $0x12] sm:$0xff]
    %v415 = vld [vmem:[#allocation1 + $0x1b] sm:$0xff]
    %v416 = vld [vmem:[#allocation1 + $0x24] sm:$0xff]
    %v417 = vld [vmem:[#allocation1 + $0x2d] sm:$0xff]
    %v418 = vld [vmem:[#allocation1 + $0x36] sm:$0xff]
    %v419 = vld [vmem:[#allocation1 + $0x3f] sm:$0xff]
    %421 = vst [vmem:[#allocation1] ss:$9 sm:$0xff] %v153
    %v422 = vld [vmem:[#allocation1] sm:$0xff]
    %v423 = vld [vmem:[#allocation1 + $0x9] sm:$0xff]
    %v424 = vld [vmem:[#allocation1 + $0x12] sm:$0xff]
    %v425 = vld [vmem:[#allocation1 + $0x1b] sm:$0xff]
    %v426 = vld [vmem:[#allocation1 + $0x24] sm:$0xff]
    %v427 = vld [vmem:[#allocation1 + $0x2d] sm:$0xff]
    %v428 = vld [vmem:[#allocation1 + $0x36] sm:$0xff]
    %v429 = vld [vmem:[#allocation1 + $0x3f] sm:$0xff]
    %v702 = vunpack.c.l.b16 %v154
    %v703 = vunpack.c.h.b16 %v154
    %v704 = vunpack.c.l.b16 %v155
    %v705 = vunpack.c.h.b16 %v155
    %v706 = vunpack.c.l.b16 %v156
    %v707 = vunpack.c.h.b16 %v156
    %v708 = vunpack.c.l.b16 %v157
    %v709 = vunpack.c.h.b16 %v157
    %v710 = vunpack.c.l.b16 %v158
    %v711 = vunpack.c.h.b16 %v158
    %v712 = vunpack.c.l.b16 %v159
    %v713 = vunpack.c.h.b16 %v159
    %v714 = vunpack.c.l.b16 %v160
    %v715 = vunpack.c.h.b16 %v160
    %v716 = vunpack.c.l.b16 %v161
    %v717 = vunpack.c.h.b16 %v161
    %v718 = vunpack.c.l.b16 %v162
    %v719 = vunpack.c.h.b16 %v162
    %v720 = vunpack.c.l.b16 %v163
    %v721 = vunpack.c.h.b16 %v163
    %v722 = vunpack.c.l.b16 %v164
    %v723 = vunpack.c.h.b16 %v164
    %v724 = vunpack.c.l.b16 %v165
    %v725 = vunpack.c.h.b16 %v165
    %v726 = vunpack.c.l.b16 %v166
    %v727 = vunpack.c.h.b16 %v166
    %v728 = vunpack.c.l.b16 %v167
    %v729 = vunpack.c.h.b16 %v167
    %v730 = vunpack.c.l.b16 %v168
    %v731 = vunpack.c.h.b16 %v168
    %v732 = vunpack.c.l.b16 %v169
    %v733 = vunpack.c.h.b16 %v169
    %v734 = vunpack.c.l.b16 %v170
    %v735 = vunpack.c.h.b16 %v170
    %v736 = vunpack.c.l.b16 %v171
    %v737 = vunpack.c.h.b16 %v171
    %v738 = vunpack.c.l.b16 %v172
    %v739 = vunpack.c.h.b16 %v172
    %v740 = vunpack.c.l.b16 %v173
    %v741 = vunpack.c.h.b16 %v173
    %v742 = vunpack.c.l.b16 %v174
    %v743 = vunpack.c.h.b16 %v174
    %v744 = vunpack.c.l.b16 %v175
    %v745 = vunpack.c.h.b16 %v175
    %v746 = vunpack.c.l.b16 %v176
    %v747 = vunpack.c.h.b16 %v176
    %v748 = vunpack.c.l.b16 %v177
    %v749 = vunpack.c.h.b16 %v177
    %v750 = vunpack.c.l.b16 %v178
    %v751 = vunpack.c.h.b16 %v178
    %v752 = vunpack.c.l.b16 %v179
    %v753 = vunpack.c.h.b16 %v179
    %v754 = vunpack.c.l.b16 %v180
    %v755 = vunpack.c.h.b16 %v180
    %v756 = vunpack.c.l.b16 %v181
    %v757 = vunpack.c.h.b16 %v181
    %v758 = vunpack.c.l.b16 %v182
    %v759 = vunpack.c.h.b16 %v182
    %v760 = vunpack.c.l.b16 %v183
    %v761 = vunpack.c.h.b16 %v183
    %v762 = vunpack.c.l.b16 %v184
    %v763 = vunpack.c.h.b16 %v184
    %v764 = vunpack.c.l.b16 %v185
    %v765 = vunpack.c.h.b16 %v185
    %v766 = vunpack.c.l.b16 %v186
    %v767 = vunpack.c.h.b16 %v186
    %v768 = vunpack.c.l.b16 %v187
    %v769 = vunpack.c.h.b16 %v187
    %v770 = vunpack.c.l.b16 %v188
    %v771 = vunpack.c.h.b16 %v188
    %v772 = vunpack.c.l.b16 %v189
    %v773 = vunpack.c.h.b16 %v189
    %v774 = vunpack.c.l.b16 %v190
    %v775 = vunpack.c.h.b16 %v190
    %v776 = vunpack.c.l.b16 %v191
    %v777 = vunpack.c.h.b16 %v191
    %v778 = vunpack.c.l.b16 %v192
    %v779 = vunpack.c.h.b16 %v192
    %v780 = vunpack.c.l.b16 %v193
    %v781 = vunpack.c.h.b16 %v193
    %v782 = vunpack.c.l.b16 %v194
    %v783 = vunpack.c.h.b16 %v194
    %v784 = vunpack.c.l.b16 %v195
    %v785 = vunpack.c.h.b16 %v195
    %v786 = vunpack.c.l.b16 %v196
    %v787 = vunpack.c.h.b16 %v196
    %v788 = vunpack.c.l.b16 %v197
    %v789 = vunpack.c.h.b16 %v197
    %v790 = vunpack.c.l.b16 %v198
    %v791 = vunpack.c.h.b16 %v198
    %v792 = vunpack.c.l.b16 %v199
    %v793 = vunpack.c.h.b16 %v199
    %v794 = vunpack.c.l.b16 %v200
    %v795 = vunpack.c.h.b16 %v200
    %v796 = vunpack.c.l.b16 %v201
    %v797 = vunpack.c.h.b16 %v201
    %v798 = vunpack.c.l.b16 %v202
    %v799 = vunpack.c.h.b16 %v202
    %v800 = vunpack.c.l.b16 %v203
    %v801 = vunpack.c.h.b16 %v203
    %v802 = vunpack.c.l.b16 %v204
    %v803 = vunpack.c.h.b16 %v204
    %v804 = vunpack.c.l.b16 %v205
    %v805 = vunpack.c.h.b16 %v205
    %v806 = vunpack.c.l.b16 %v206
    %v807 = vunpack.c.h.b16 %v206
    %v808 = vunpack.c.l.b16 %v207
    %v809 = vunpack.c.h.b16 %v207
    %v810 = vunpack.c.l.b16 %v208
    %v811 = vunpack.c.h.b16 %v208
    %v812 = vunpack.c.l.b16 %v209
    %v813 = vunpack.c.h.b16 %v209
    %v814 = vunpack.c.l.b16 %v210
    %v815 = vunpack.c.h.b16 %v210
    %v816 = vunpack.c.l.b16 %v211
    %v817 = vunpack.c.h.b16 %v211
    %v818 = vunpack.c.l.b16 %v212
    %v819 = vunpack.c.h.b16 %v212
    %v820 = vunpack.c.l.b16 %v213
    %v821 = vunpack.c.h.b16 %v213
    %v822 = vunpack.c.l.b16 %v214
    %v823 = vunpack.c.h.b16 %v214
    %v824 = vunpack.c.l.b16 %v215
    %v825 = vunpack.c.h.b16 %v215
    %v826 = vunpack.c.l.b16 %v216
    %v827 = vunpack.c.h.b16 %v216
    %v828 = vunpack.c.l.b16 %v217
    %v829 = vunpack.c.h.b16 %v217
    %v830 = vunpack.c.l.b16 %v218
    %v831 = vunpack.c.h.b16 %v218
    %v832 = vunpack.c.l.b16 %v219
    %v833 = vunpack.c.h.b16 %v219
    %v834 = vunpack.c.l.b16 %v220
    %v835 = vunpack.c.h.b16 %v220
    %v836 = vunpack.c.l.b16 %v221
    %v837 = vunpack.c.h.b16 %v221
    %v838 = vunpack.c.l.b16 %v222
    %v839 = vunpack.c.h.b16 %v222
    %v840 = vunpack.c.l.b16 %v223
    %v841 = vunpack.c.h.b16 %v223
    %v842 = vunpack.c.l.b16 %v224
    %v843 = vunpack.c.h.b16 %v224
    %v844 = vunpack.c.l.b16 %v225
    %v845 = vunpack.c.h.b16 %v225
    %v846 = vunpack.c.l.b16 %v226
    %v847 = vunpack.c.h.b16 %v226
    %v848 = vunpack.c.l.b16 %v227
    %v849 = vunpack.c.h.b16 %v227
    %v850 = vunpack.c.l.b16 %v228
    %v851 = vunpack.c.h.b16 %v228
    %v852 = vunpack.c.l.b16 %v229
    %v853 = vunpack.c.h.b16 %v229
    %v854 = vunpack.c.l.b16 %v230
    %v855 = vunpack.c.h.b16 %v230
    %v856 = vunpack.c.l.b16 %v231
    %v857 = vunpack.c.h.b16 %v231
    %v858 = vunpack.c.l.b16 %v232
    %v859 = vunpack.c.h.b16 %v232
    %v860 = vunpack.c.l.b16 %v233
    %v861 = vunpack.c.h.b16 %v233
    %v862 = vunpack.c.l.b16 %v234
    %v863 = vunpack.c.h.b16 %v234
    %v864 = vunpack.c.l.b16 %v235
    %v865 = vunpack.c.h.b16 %v235
    %v866 = vunpack.c.l.b16 %v236
    %v867 = vunpack.c.h.b16 %v236
    %v868 = vunpack.c.l.b16 %v237
    %v869 = vunpack.c.h.b16 %v237
    %v870 = vunpack.c.l.b16 %v238
    %v871 = vunpack.c.h.b16 %v238
    %v872 = vunpack.c.l.b16 %v239
    %v873 = vunpack.c.h.b16 %v239
    %v874 = vunpack.c.l.b16 %v240
    %v875 = vunpack.c.h.b16 %v240
    %v876 = vunpack.c.l.b16 %v241
    %v877 = vunpack.c.h.b16 %v241
    %v878 = vunpack.c.l.b16 %v242
    %v879 = vunpack.c.h.b16 %v242
    %v880 = vunpack.c.l.b16 %v243
    %v881 = vunpack.c.h.b16 %v243
    %v882 = vunpack.c.l.b16 %v244
    %v883 = vunpack.c.h.b16 %v244
    %v884 = vunpack.c.l.b16 %v245
    %v885 = vunpack.c.h.b16 %v245
    %v886 = vunpack.c.l.b16 %v246
    %v887 = vunpack.c.h.b16 %v246
    %v888 = vunpack.c.l.b16 %v247
    %v889 = vunpack.c.h.b16 %v247
    %v890 = vunpack.c.l.b16 %v248
    %v891 = vunpack.c.h.b16 %v248
    %v892 = vunpack.c.l.b16 %v249
    %v893 = vunpack.c.h.b16 %v249
    %v894 = vunpack.c.l.b16 %v250
    %v895 = vunpack.c.h.b16 %v250
    %v896 = vunpack.c.l.b16 %v251
    %v897 = vunpack.c.h.b16 %v251
    %v898 = vunpack.c.l.b16 %v252
    %v899 = vunpack.c.h.b16 %v252
    %v900 = vunpack.c.l.b16 %v253
    %v901 = vunpack.c.h.b16 %v253
    %v902 = vunpack.c.l.b16 %v254
    %v903 = vunpack.c.h.b16 %v254
    %v904 = vunpack.c.l.b16 %v255
    %v905 = vunpack.c.h.b16 %v255
    %v906 = vunpack.c.l.b16 %v256
    %v907 = vunpack.c.h.b16 %v256
    %v908 = vunpack.c.l.b16 %v257
    %v909 = vunpack.c.h.b16 %v257
    %v910 = vunpack.c.l.b16 %v258
    %v911 = vunpack.c.h.b16 %v258
    %v912 = vunpack.c.l.b16 %v259
    %v913 = vunpack.c.h.b16 %v259
    %v914 = vunpack.c.l.b16 %v260
    %v915 = vunpack.c.h.b16 %v260
    %v916 = vunpack.c.l.b16 %v261
    %v917 = vunpack.c.h.b16 %v261
    %v918 = vunpack.c.l.b16 %v262
    %v919 = vunpack.c.h.b16 %v262
    %v920 = vunpack.c.l.b16 %v263
    %v921 = vunpack.c.h.b16 %v263
    %v922 = vunpack.c.l.b16 %v264
    %v923 = vunpack.c.h.b16 %v264
    %v924 = vunpack.c.l.b16 %v265
    %v925 = vunpack.c.h.b16 %v265
    %v926 = vunpack.c.l.b16 %v266
    %v927 = vunpack.c.h.b16 %v266
    %v928 = vunpack.c.l.b16 %v267
    %v929 = vunpack.c.h.b16 %v267
    %v930 = vunpack.c.l.b16 %v268
    %v931 = vunpack.c.h.b16 %v268
    %v932 = vunpack.c.l.b16 %v269
    %v933 = vunpack.c.h.b16 %v269
    %v934 = vunpack.c.l.b16 %v270
    %v935 = vunpack.c.h.b16 %v270
    %v936 = vunpack.c.l.b16 %v271
    %v937 = vunpack.c.h.b16 %v271
    %v938 = vunpack.c.l.b16 %v272
    %v939 = vunpack.c.h.b16 %v272
    %v940 = vunpack.c.l.b16 %v273
    %v941 = vunpack.c.h.b16 %v273
    %v942 = vunpack.c.l.b16 %v274
    %v943 = vunpack.c.h.b16 %v274
    %v944 = vunpack.c.l.b16 %v275
    %v945 = vunpack.c.h.b16 %v275
    %v946 = vunpack.c.l.b16 %v276
    %v947 = vunpack.c.h.b16 %v276
    %v948 = vunpack.c.l.b16 %v277
    %v949 = vunpack.c.h.b16 %v277
    %v950 = vunpack.c.l.b16 %v278
    %v951 = vunpack.c.h.b16 %v278
    %v952 = vunpack.c.l.b16 %v279
    %v953 = vunpack.c.h.b16 %v279
    %v954 = vunpack.c.l.b16 %v280
    %v955 = vunpack.c.h.b16 %v280
    %v956 = vunpack.c.l.b16 %v281
    %v957 = vunpack.c.h.b16 %v281
    %v958 = vunpack.c.l.b16 %v282
    %v959 = vunpack.c.h.b16 %v282
    %v960 = vunpack.c.l.b16 %v283
    %v961 = vunpack.c.h.b16 %v283
    %v962 = vunpack.c.l.b16 %v284
    %v963 = vunpack.c.h.b16 %v284
    %v964 = vunpack.c.l.b16 %v285
    %v965 = vunpack.c.h.b16 %v285
    %v966 = vunpack.c.l.b16 %v286
    %v967 = vunpack.c.h.b16 %v286
    %v968 = vunpack.c.l.b16 %v287
    %v969 = vunpack.c.h.b16 %v287
    %v970 = vunpack.c.l.b16 %v288
    %v971 = vunpack.c.h.b16 %v288
    %v972 = vunpack.c.l.b16 %v289
    %v973 = vunpack.c.h.b16 %v289
    %v974 = vunpack.c.l.b16 %v290
    %v975 = vunpack.c.h.b16 %v290
    %v976 = vunpack.c.l.b16 %v291
    %v977 = vunpack.c.h.b16 %v291
    %v978 = vunpack.c.l.b16 %v292
    %v979 = vunpack.c.h.b16 %v292
    %v980 = vunpack.c.l.b16 %v293
    %v981 = vunpack.c.h.b16 %v293
    %v982 = vunpack.c.l.b16 %v294
    %v983 = vunpack.c.h.b16 %v294
    %v984 = vunpack.c.l.b16 %v295
    %v985 = vunpack.c.h.b16 %v295
    %v986 = vunpack.c.l.b16 %v296
    %v987 = vunpack.c.h.b16 %v296
    %v988 = vunpack.c.l.b16 %v297
    %v989 = vunpack.c.h.b16 %v297
    %v990 = vunpack.c.l.b16 %v298
    %v991 = vunpack.c.h.b16 %v298
    %v992 = vunpack.c.l.b16 %v299
    %v993 = vunpack.c.h.b16 %v299
    %v994 = vunpack.c.l.b16 %v300
    %v995 = vunpack.c.h.b16 %v300
    %v996 = vunpack.c.l.b16 %v301
    %v997 = vunpack.c.h.b16 %v301
    %v998 = vunpack.c.l.b16 %v302
    %v999 = vunpack.c.h.b16 %v302
    %v1000 = vunpack.c.l.b16 %v303
    %v1001 = vunpack.c.h.b16 %v303
    %v1002 = vunpack.c.l.b16 %v304
    %v1003 = vunpack.c.h.b16 %v304
    %v1004 = vunpack.c.l.b16 %v305
    %v1005 = vunpack.c.h.b16 %v305
    %v1006 = vunpack.c.l.b16 %v306
    %v1007 = vunpack.c.h.b16 %v306
    %v1008 = vunpack.c.l.b16 %v307
    %v1009 = vunpack.c.h.b16 %v307
    %v1010 = vunpack.c.l.b16 %v308
    %v1011 = vunpack.c.h.b16 %v308
    %v1012 = vunpack.c.l.b16 %v309
    %v1013 = vunpack.c.h.b16 %v309
    %v1014 = vunpack.c.l.b16 %v310
    %v1015 = vunpack.c.h.b16 %v310
    %v1016 = vunpack.c.l.b16 %v311
    %v1017 = vunpack.c.h.b16 %v311
    %v1018 = vunpack.c.l.b16 %v312
    %v1019 = vunpack.c.h.b16 %v312
    %v1020 = vunpack.c.l.b16 %v313
    %v1021 = vunpack.c.h.b16 %v313
    %v1022 = vunpack.c.l.b16 %v314
    %v1023 = vunpack.c.h.b16 %v314
    %v1024 = vunpack.c.l.b16 %v315
    %v1025 = vunpack.c.h.b16 %v315
    %v1026 = vunpack.c.l.b16 %v316
    %v1027 = vunpack.c.h.b16 %v316
    %v1028 = vunpack.c.l.b16 %v317
    %v1029 = vunpack.c.h.b16 %v317
    %v1030 = vunpack.c.l.b16 %v318
    %v1031 = vunpack.c.h.b16 %v318
    %v1032 = vunpack.c.l.b16 %v319
    %v1033 = vunpack.c.h.b16 %v319
    %v1034 = vunpack.c.l.b16 %v320
    %v1035 = vunpack.c.h.b16 %v320
    %v1036 = vunpack.c.l.b16 %v321
    %v1037 = vunpack.c.h.b16 %v321
    %v1038 = vunpack.c.l.b16 %v322
    %v1039 = vunpack.c.h.b16 %v322
    %v1040 = vunpack.c.l.b16 %v323
    %v1041 = vunpack.c.h.b16 %v323
    %v1042 = vunpack.c.l.b16 %v324
    %v1043 = vunpack.c.h.b16 %v324
    %v1044 = vunpack.c.l.b16 %v325
    %v1045 = vunpack.c.h.b16 %v325
    %v1046 = vunpack.c.l.b16 %v326
    %v1047 = vunpack.c.h.b16 %v326
    %v1048 = vunpack.c.l.b16 %v327
    %v1049 = vunpack.c.h.b16 %v327
    %v1050 = vunpack.c.l.b16 %v328
    %v1051 = vunpack.c.h.b16 %v328
    %v1052 = vunpack.c.l.b16 %v329
    %v1053 = vunpack.c.h.b16 %v329
    %v1054 = vunpack.c.l.b16 %v330
    %v1055 = vunpack.c.h.b16 %v330
    %v1056 = vunpack.c.l.b16 %v331
    %v1057 = vunpack.c.h.b16 %v331
    %v1058 = vunpack.c.l.b16 %v332
    %v1059 = vunpack.c.h.b16 %v332
    %v1060 = vunpack.c.l.b16 %v333
    %v1061 = vunpack.c.h.b16 %v333
    %v1062 = vunpack.c.l.b16 %v334
    %v1063 = vunpack.c.h.b16 %v334
    %v1064 = vunpack.c.l.b16 %v335
    %v1065 = vunpack.c.h.b16 %v335
    %v1066 = vunpack.c.l.b16 %v336
    %v1067 = vunpack.c.h.b16 %v336
    %v1068 = vunpack.c.l.b16 %v337
    %v1069 = vunpack.c.h.b16 %v337
    %v1070 = vunpack.c.l.b16 %v338
    %v1071 = vunpack.c.h.b16 %v338
    %v1072 = vunpack.c.l.b16 %v339
    %v1073 = vunpack.c.h.b16 %v339
    %v1074 = vunpack.c.l.b16 %v340
    %v1075 = vunpack.c.h.b16 %v340
    %v1076 = vunpack.c.l.b16 %v341
    %v1077 = vunpack.c.h.b16 %v341
    %v1078 = vunpack.c.l.b16 %v342
    %v1079 = vunpack.c.h.b16 %v342
    %v1080 = vunpack.c.l.b16 %v343
    %v1081 = vunpack.c.h.b16 %v343
    %v1082 = vunpack.c.l.b16 %v344
    %v1083 = vunpack.c.h.b16 %v344
    %v1084 = vunpack.c.l.b16 %v345
    %v1085 = vunpack.c.h.b16 %v345
    %v1086 = vunpack.c.l.b16 %v346
    %v1087 = vunpack.c.h.b16 %v346
    %v1088 = vunpack.c.l.b16 %v347
    %v1089 = vunpack.c.h.b16 %v347
    %v1090 = vunpack.c.l.b16 %v348
    %v1091 = vunpack.c.h.b16 %v348
    %v1092 = vunpack.c.l.b16 %v349
    %v1093 = vunpack.c.h.b16 %v349
    %v1094 = vunpack.c.l.b16 %v350
    %v1095 = vunpack.c.h.b16 %v350
    %v1096 = vunpack.c.l.b16 %v351
    %v1097 = vunpack.c.h.b16 %v351
    %v1098 = vunpack.c.l.b16 %v352
    %v1099 = vunpack.c.h.b16 %v352
    %v1100 = vunpack.c.l.b16 %v353
    %v1101 = vunpack.c.h.b16 %v353
    %v1102 = vunpack.c.l.b16 %v354
    %v1103 = vunpack.c.h.b16 %v354
    %v1104 = vunpack.c.l.b16 %v355
    %v1105 = vunpack.c.h.b16 %v355
    %v1106 = vunpack.c.l.b16 %v356
    %v1107 = vunpack.c.h.b16 %v356
    %v1108 = vunpack.c.l.b16 %v357
    %v1109 = vunpack.c.h.b16 %v357
    %v1110 = vunpack.c.l.b16 %v358
    %v1111 = vunpack.c.h.b16 %v358
    %v1112 = vunpack.c.l.b16 %v359
    %v1113 = vunpack.c.h.b16 %v359
    %v1114 = vunpack.c.l.b16 %v360
    %v1115 = vunpack.c.h.b16 %v360
    %v1116 = vunpack.c.l.b16 %v361
    %v1117 = vunpack.c.h.b16 %v361
    %v1118 = vunpack.c.l.b16 %v362
    %v1119 = vunpack.c.h.b16 %v362
    %v1120 = vunpack.c.l.b16 %v363
    %v1121 = vunpack.c.h.b16 %v363
    %v1122 = vunpack.c.l.b16 %v364
    %v1123 = vunpack.c.h.b16 %v364
    %v1124 = vunpack.c.l.b16 %v365
    %v1125 = vunpack.c.h.b16 %v365
    %v1126 = vunpack.c.l.b16 %v366
    %v1127 = vunpack.c.h.b16 %v366
    %v1128 = vunpack.c.l.b16 %v367
    %v1129 = vunpack.c.h.b16 %v367
    %v1130 = vunpack.c.l.b16 %v368
    %v1131 = vunpack.c.h.b16 %v368
    %v1132 = vunpack.c.l.b16 %v369
    %v1133 = vunpack.c.h.b16 %v369
    %v1134 = vunpack.c.l.b16 %v370
    %v1135 = vunpack.c.h.b16 %v370
    %v1136 = vunpack.c.l.b16 %v371
    %v1137 = vunpack.c.h.b16 %v371
    %v1138 = vunpack.c.l.b16 %v372
    %v1139 = vunpack.c.h.b16 %v372
    %v1140 = vunpack.c.l.b16 %v373
    %v1141 = vunpack.c.h.b16 %v373
    %v1142 = vunpack.c.l.b16 %v374
    %v1143 = vunpack.c.h.b16 %v374
    %v1144 = vunpack.c.l.b16 %v375
    %v1145 = vunpack.c.h.b16 %v375
    %v1146 = vunpack.c.l.b16 %v376
    %v1147 = vunpack.c.h.b16 %v376
    %v1148 = vunpack.c.l.b16 %v377
    %v1149 = vunpack.c.h.b16 %v377
    %v1150 = vunpack.c.l.b16 %v378
    %v1151 = vunpack.c.h.b16 %v378
    %v1152 = vunpack.c.l.b16 %v379
    %v1153 = vunpack.c.h.b16 %v379
    %v1154 = vunpack.c.l.b16 %v380
    %v1155 = vunpack.c.h.b16 %v380
    %v1156 = vunpack.c.l.b16 %v381
    %v1157 = vunpack.c.h.b16 %v381
    %v1158 = vunpack.c.l.b16 %v382
    %v1159 = vunpack.c.h.b16 %v382
    %v1160 = vunpack.c.l.b16 %v383
    %v1161 = vunpack.c.h.b16 %v383
    %v1162 = vunpack.c.l.b16 %v384
    %v1163 = vunpack.c.h.b16 %v384
    %v1164 = vunpack.c.l.b16 %v385
    %v1165 = vunpack.c.h.b16 %v385
    %v1166 = vunpack.c.l.b16 %v386
    %v1167 = vunpack.c.h.b16 %v386
    %v1168 = vunpack.c.l.b16 %v387
    %v1169 = vunpack.c.h.b16 %v387
    %v1170 = vunpack.c.l.b16 %v388
    %v1171 = vunpack.c.h.b16 %v388
    %v1172 = vunpack.c.l.b16 %v389
    %v1173 = vunpack.c.h.b16 %v389
    %v1174 = vunpack.c.l.b16 %v390
    %v1175 = vunpack.c.h.b16 %v390
    %v1176 = vunpack.c.l.b16 %v391
    %v1177 = vunpack.c.h.b16 %v391
    %v1178 = vunpack.c.l.b16 %v392
    %v1179 = vunpack.c.h.b16 %v392
    %v1180 = vunpack.c.l.b16 %v393
    %v1181 = vunpack.c.h.b16 %v393
    %v1182 = vunpack.c.l.b16 %v394
    %v1183 = vunpack.c.h.b16 %v394
    %v1184 = vunpack.c.l.b16 %v395
    %v1185 = vunpack.c.h.b16 %v395
    %v1186 = vunpack.c.l.b16 %v396
    %v1187 = vunpack.c.h.b16 %v396
    %v1188 = vunpack.c.l.b16 %v397
    %v1189 = vunpack.c.h.b16 %v397
    %v1190 = vunpack.c.l.b16 %v398
    %v1191 = vunpack.c.h.b16 %v398
    %v1192 = vunpack.c.l.b16 %v399
    %v1193 = vunpack.c.h.b16 %v399
    %v1194 = vunpack.c.l.b16 %v400
    %v1195 = vunpack.c.h.b16 %v400
    %v1196 = vunpack.c.l.b16 %v401
    %v1197 = vunpack.c.h.b16 %v401
    %v1198 = vunpack.c.l.b16 %v402
    %v1199 = vunpack.c.h.b16 %v402
    %v1200 = vunpack.c.l.b16 %v403
    %v1201 = vunpack.c.h.b16 %v403
    %v1202 = vunpack.c.l.b16 %v404
    %v1203 = vunpack.c.h.b16 %v404
    %v1204 = vunpack.c.l.b16 %v405
    %v1205 = vunpack.c.h.b16 %v405
    %v1206 = vunpack.c.l.b16 %v406
    %v1207 = vunpack.c.h.b16 %v406
    %v1208 = vunpack.c.l.b16 %v407
    %v1209 = vunpack.c.h.b16 %v407
    %v1210 = vunpack.c.l.b16 %v408
    %v1211 = vunpack.c.h.b16 %v408
    %v1212 = vunpack.c.l.b16 %v409
    %v1213 = vunpack.c.h.b16 %v409
    %v1214 = vpack.c.b16 %v704, %v702
    %v1215 = vpack.c.b16 %v705, %v703
    %v1216 = vpack.c.b16 %v708, %v706
    %v1217 = vpack.c.b16 %v709, %v707
    %v1218 = vpack.c.b16 %v712, %v710
    %v1219 = vpack.c.b16 %v713, %v711
    %v1220 = vpack.c.b16 %v716, %v714
    %v1221 = vpack.c.b16 %v717, %v715
    %v1222 = vpack.c.b16 %v720, %v718
    %v1223 = vpack.c.b16 %v721, %v719
    %v1224 = vpack.c.b16 %v724, %v722
    %v1225 = vpack.c.b16 %v725, %v723
    %v1226 = vpack.c.b16 %v728, %v726
    %v1227 = vpack.c.b16 %v729, %v727
    %v1228 = vpack.c.b16 %v732, %v730
    %v1229 = vpack.c.b16 %v733, %v731
    %v1230 = vpack.c.b16 %v736, %v734
    %v1231 = vpack.c.b16 %v737, %v735
    %v1232 = vpack.c.b16 %v740, %v738
    %v1233 = vpack.c.b16 %v741, %v739
    %v1234 = vpack.c.b16 %v744, %v742
    %v1235 = vpack.c.b16 %v745, %v743
    %v1236 = vpack.c.b16 %v748, %v746
    %v1237 = vpack.c.b16 %v749, %v747
    %v1238 = vpack.c.b16 %v752, %v750
    %v1239 = vpack.c.b16 %v753, %v751
    %v1240 = vpack.c.b16 %v756, %v754
    %v1241 = vpack.c.b16 %v757, %v755
    %v1242 = vpack.c.b16 %v760, %v758
    %v1243 = vpack.c.b16 %v761, %v759
    %v1244 = vpack.c.b16 %v764, %v762
    %v1245 = vpack.c.b16 %v765, %v763
    %v1246 = vpack.c.b16 %v768, %v766
    %v1247 = vpack.c.b16 %v769, %v767
    %v1248 = vpack.c.b16 %v772, %v770
    %v1249 = vpack.c.b16 %v773, %v771
    %v1250 = vpack.c.b16 %v776, %v774
    %v1251 = vpack.c.b16 %v777, %v775
    %v1252 = vpack.c.b16 %v780, %v778
    %v1253 = vpack.c.b16 %v781, %v779
    %v1254 = vpack.c.b16 %v784, %v782
    %v1255 = vpack.c.b16 %v785, %v783
    %v1256 = vpack.c.b16 %v788, %v786
    %v1257 = vpack.c.b16 %v789, %v787
    %v1258 = vpack.c.b16 %v792, %v790
    %v1259 = vpack.c.b16 %v793, %v791
    %v1260 = vpack.c.b16 %v796, %v794
    %v1261 = vpack.c.b16 %v797, %v795
    %v1262 = vpack.c.b16 %v800, %v798
    %v1263 = vpack.c.b16 %v801, %v799
    %v1264 = vpack.c.b16 %v804, %v802
    %v1265 = vpack.c.b16 %v805, %v803
    %v1266 = vpack.c.b16 %v808, %v806
    %v1267 = vpack.c.b16 %v809, %v807
    %v1268 = vpack.c.b16 %v812, %v810
    %v1269 = vpack.c.b16 %v813, %v811
    %v1270 = vpack.c.b16 %v816, %v814
    %v1271 = vpack.c.b16 %v817, %v815
    %v1272 = vpack.c.b16 %v820, %v818
    %v1273 = vpack.c.b16 %v821, %v819
    %v1274 = vpack.c.b16 %v824, %v822
    %v1275 = vpack.c.b16 %v825, %v823
    %v1276 = vpack.c.b16 %v828, %v826
    %v1277 = vpack.c.b16 %v829, %v827
    %v1278 = vpack.c.b16 %v832, %v830
    %v1279 = vpack.c.b16 %v833, %v831
    %v1280 = vpack.c.b16 %v836, %v834
    %v1281 = vpack.c.b16 %v837, %v835
    %v1282 = vpack.c.b16 %v840, %v838
    %v1283 = vpack.c.b16 %v841, %v839
    %v1284 = vpack.c.b16 %v844, %v842
    %v1285 = vpack.c.b16 %v845, %v843
    %v1286 = vpack.c.b16 %v848, %v846
    %v1287 = vpack.c.b16 %v849, %v847
    %v1288 = vpack.c.b16 %v852, %v850
    %v1289 = vpack.c.b16 %v853, %v851
    %v1290 = vpack.c.b16 %v856, %v854
    %v1291 = vpack.c.b16 %v857, %v855
    %v1292 = vpack.c.b16 %v860, %v858
    %v1293 = vpack.c.b16 %v861, %v859
    %v1294 = vpack.c.b16 %v864, %v862
    %v1295 = vpack.c.b16 %v865, %v863
    %v1296 = vpack.c.b16 %v868, %v866
    %v1297 = vpack.c.b16 %v869, %v867
    %v1298 = vpack.c.b16 %v872, %v870
    %v1299 = vpack.c.b16 %v873, %v871
    %v1300 = vpack.c.b16 %v876, %v874
    %v1301 = vpack.c.b16 %v877, %v875
    %v1302 = vpack.c.b16 %v880, %v878
    %v1303 = vpack.c.b16 %v881, %v879
    %v1304 = vpack.c.b16 %v884, %v882
    %v1305 = vpack.c.b16 %v885, %v883
    %v1306 = vpack.c.b16 %v888, %v886
    %v1307 = vpack.c.b16 %v889, %v887
    %v1308 = vpack.c.b16 %v892, %v890
    %v1309 = vpack.c.b16 %v893, %v891
    %v1310 = vpack.c.b16 %v896, %v894
    %v1311 = vpack.c.b16 %v897, %v895
    %v1312 = vpack.c.b16 %v900, %v898
    %v1313 = vpack.c.b16 %v901, %v899
    %v1314 = vpack.c.b16 %v904, %v902
    %v1315 = vpack.c.b16 %v905, %v903
    %v1316 = vpack.c.b16 %v908, %v906
    %v1317 = vpack.c.b16 %v909, %v907
    %v1318 = vpack.c.b16 %v912, %v910
    %v1319 = vpack.c.b16 %v913, %v911
    %v1320 = vpack.c.b16 %v916, %v914
    %v1321 = vpack.c.b16 %v917, %v915
    %v1322 = vpack.c.b16 %v920, %v918
    %v1323 = vpack.c.b16 %v921, %v919
    %v1324 = vpack.c.b16 %v924, %v922
    %v1325 = vpack.c.b16 %v925, %v923
    %v1326 = vpack.c.b16 %v928, %v926
    %v1327 = vpack.c.b16 %v929, %v927
    %v1328 = vpack.c.b16 %v932, %v930
    %v1329 = vpack.c.b16 %v933, %v931
    %v1330 = vpack.c.b16 %v936, %v934
    %v1331 = vpack.c.b16 %v937, %v935
    %v1332 = vpack.c.b16 %v940, %v938
    %v1333 = vpack.c.b16 %v941, %v939
    %v1334 = vpack.c.b16 %v944, %v942
    %v1335 = vpack.c.b16 %v945, %v943
    %v1336 = vpack.c.b16 %v948, %v946
    %v1337 = vpack.c.b16 %v949, %v947
    %v1338 = vpack.c.b16 %v952, %v950
    %v1339 = vpack.c.b16 %v953, %v951
    %v1340 = vpack.c.b16 %v956, %v954
    %v1341 = vpack.c.b16 %v957, %v955
    %v1342 = vpack.c.b16 %v960, %v958
    %v1343 = vpack.c.b16 %v961, %v959
    %v1344 = vpack.c.b16 %v964, %v962
    %v1345 = vpack.c.b16 %v965, %v963
    %v1346 = vpack.c.b16 %v968, %v966
    %v1347 = vpack.c.b16 %v969, %v967
    %v1348 = vpack.c.b16 %v972, %v970
    %v1349 = vpack.c.b16 %v973, %v971
    %v1350 = vpack.c.b16 %v976, %v974
    %v1351 = vpack.c.b16 %v977, %v975
    %v1352 = vpack.c.b16 %v980, %v978
    %v1353 = vpack.c.b16 %v981, %v979
    %v1354 = vpack.c.b16 %v984, %v982
    %v1355 = vpack.c.b16 %v985, %v983
    %v1356 = vpack.c.b16 %v988, %v986
    %v1357 = vpack.c.b16 %v989, %v987
    %v1358 = vpack.c.b16 %v992, %v990
    %v1359 = vpack.c.b16 %v993, %v991
    %v1360 = vpack.c.b16 %v996, %v994
    %v1361 = vpack.c.b16 %v997, %v995
    %v1362 = vpack.c.b16 %v1000, %v998
    %v1363 = vpack.c.b16 %v1001, %v999
    %v1364 = vpack.c.b16 %v1004, %v1002
    %v1365 = vpack.c.b16 %v1005, %v1003
    %v1366 = vpack.c.b16 %v1008, %v1006
    %v1367 = vpack.c.b16 %v1009, %v1007
    %v1368 = vpack.c.b16 %v1012, %v1010
    %v1369 = vpack.c.b16 %v1013, %v1011
    %v1370 = vpack.c.b16 %v1016, %v1014
    %v1371 = vpack.c.b16 %v1017, %v1015
    %v1372 = vpack.c.b16 %v1020, %v1018
    %v1373 = vpack.c.b16 %v1021, %v1019
    %v1374 = vpack.c.b16 %v1024, %v1022
    %v1375 = vpack.c.b16 %v1025, %v1023
    %v1376 = vpack.c.b16 %v1028, %v1026
    %v1377 = vpack.c.b16 %v1029, %v1027
    %v1378 = vpack.c.b16 %v1032, %v1030
    %v1379 = vpack.c.b16 %v1033, %v1031
    %v1380 = vpack.c.b16 %v1036, %v1034
    %v1381 = vpack.c.b16 %v1037, %v1035
    %v1382 = vpack.c.b16 %v1040, %v1038
    %v1383 = vpack.c.b16 %v1041, %v1039
    %v1384 = vpack.c.b16 %v1044, %v1042
    %v1385 = vpack.c.b16 %v1045, %v1043
    %v1386 = vpack.c.b16 %v1048, %v1046
    %v1387 = vpack.c.b16 %v1049, %v1047
    %v1388 = vpack.c.b16 %v1052, %v1050
    %v1389 = vpack.c.b16 %v1053, %v1051
    %v1390 = vpack.c.b16 %v1056, %v1054
    %v1391 = vpack.c.b16 %v1057, %v1055
    %v1392 = vpack.c.b16 %v1060, %v1058
    %v1393 = vpack.c.b16 %v1061, %v1059
    %v1394 = vpack.c.b16 %v1064, %v1062
    %v1395 = vpack.c.b16 %v1065, %v1063
    %v1396 = vpack.c.b16 %v1068, %v1066
    %v1397 = vpack.c.b16 %v1069, %v1067
    %v1398 = vpack.c.b16 %v1072, %v1070
    %v1399 = vpack.c.b16 %v1073, %v1071
    %v1400 = vpack.c.b16 %v1076, %v1074
    %v1401 = vpack.c.b16 %v1077, %v1075
    %v1402 = vpack.c.b16 %v1080, %v1078
    %v1403 = vpack.c.b16 %v1081, %v1079
    %v1404 = vpack.c.b16 %v1084, %v1082
    %v1405 = vpack.c.b16 %v1085, %v1083
    %v1406 = vpack.c.b16 %v1088, %v1086
    %v1407 = vpack.c.b16 %v1089, %v1087
    %v1408 = vpack.c.b16 %v1092, %v1090
    %v1409 = vpack.c.b16 %v1093, %v1091
    %v1410 = vpack.c.b16 %v1096, %v1094
    %v1411 = vpack.c.b16 %v1097, %v1095
    %v1412 = vpack.c.b16 %v1100, %v1098
    %v1413 = vpack.c.b16 %v1101, %v1099
    %v1414 = vpack.c.b16 %v1104, %v1102
    %v1415 = vpack.c.b16 %v1105, %v1103
    %v1416 = vpack.c.b16 %v1108, %v1106
    %v1417 = vpack.c.b16 %v1109, %v1107
    %v1418 = vpack.c.b16 %v1112, %v1110
    %v1419 = vpack.c.b16 %v1113, %v1111
    %v1420 = vpack.c.b16 %v1116, %v1114
    %v1421 = vpack.c.b16 %v1117, %v1115
    %v1422 = vpack.c.b16 %v1120, %v1118
    %v1423 = vpack.c.b16 %v1121, %v1119
    %v1424 = vpack.c.b16 %v1124, %v1122
    %v1425 = vpack.c.b16 %v1125, %v1123
    %v1426 = vpack.c.b16 %v1128, %v1126
    %v1427 = vpack.c.b16 %v1129, %v1127
    %v1428 = vpack.c.b16 %v1132, %v1130
    %v1429 = vpack.c.b16 %v1133, %v1131
    %v1430 = vpack.c.b16 %v1136, %v1134
    %v1431 = vpack.c.b16 %v1137, %v1135
    %v1432 = vpack.c.b16 %v1140, %v1138
    %v1433 = vpack.c.b16 %v1141, %v1139
    %v1434 = vpack.c.b16 %v1144, %v1142
    %v1435 = vpack.c.b16 %v1145, %v1143
    %v1436 = vpack.c.b16 %v1148, %v1146
    %v1437 = vpack.c.b16 %v1149, %v1147
    %v1438 = vpack.c.b16 %v1152, %v1150
    %v1439 = vpack.c.b16 %v1153, %v1151
    %v1440 = vpack.c.b16 %v1156, %v1154
    %v1441 = vpack.c.b16 %v1157, %v1155
    %v1442 = vpack.c.b16 %v1160, %v1158
    %v1443 = vpack.c.b16 %v1161, %v1159
    %v1444 = vpack.c.b16 %v1164, %v1162
    %v1445 = vpack.c.b16 %v1165, %v1163
    %v1446 = vpack.c.b16 %v1168, %v1166
    %v1447 = vpack.c.b16 %v1169, %v1167
    %v1448 = vpack.c.b16 %v1172, %v1170
    %v1449 = vpack.c.b16 %v1173, %v1171
    %v1450 = vpack.c.b16 %v1176, %v1174
    %v1451 = vpack.c.b16 %v1177, %v1175
    %v1452 = vpack.c.b16 %v1180, %v1178
    %v1453 = vpack.c.b16 %v1181, %v1179
    %v1454 = vpack.c.b16 %v1184, %v1182
    %v1455 = vpack.c.b16 %v1185, %v1183
    %v1456 = vpack.c.b16 %v1188, %v1186
    %v1457 = vpack.c.b16 %v1189, %v1187
    %v1458 = vpack.c.b16 %v1192, %v1190
    %v1459 = vpack.c.b16 %v1193, %v1191
    %v1460 = vpack.c.b16 %v1196, %v1194
    %v1461 = vpack.c.b16 %v1197, %v1195
    %v1462 = vpack.c.b16 %v1200, %v1198
    %v1463 = vpack.c.b16 %v1201, %v1199
    %v1464 = vpack.c.b16 %v1204, %v1202
    %v1465 = vpack.c.b16 %v1205, %v1203
    %v1466 = vpack.c.b16 %v1208, %v1206
    %v1467 = vpack.c.b16 %v1209, %v1207
    %v1468 = vpack.c.b16 %v1212, %v1210
    %v1469 = vpack.c.b16 %v1213, %v1211
    %1726 = vmatpush.bf16.msra.mxu0 %v1228
    %1727 = vmatpush.bf16.msra.mxu0 %v1226
    %1728 = vmatpush.bf16.msra.mxu0 %v1224
    %1729 = vmatpush.bf16.msra.mxu0 %v1222
    %1730 = vmatpush.bf16.msra.mxu0 %v1220
    %1731 = vmatpush.bf16.msra.mxu0 %v1218
    %1732 = vmatpush.bf16.msra.mxu0 %v1216
    %1733 = vmatpush.bf16.msra.mxu0 %v1214
    %1734 = vmatmul.bf16.gmra.mxu0 %v412
    %v1735 = vpop.f32.mrf.mxu0
    %v1736 = vadd.f32 0.0, %v1735
    %v1737 = vpop.f32.mrf.mxu0
    %1738 = vdwg.mxu0
    %1739 = vmatpush.bf16.msra.mxu0 %v1244
    %1740 = vmatpush.bf16.msra.mxu0 %v1242
    %1741 = vmatpush.bf16.msra.mxu0 %v1240
    %1742 = vmatpush.bf16.msra.mxu0 %v1238
    %1743 = vmatpush.bf16.msra.mxu0 %v1236
    %1744 = vmatpush.bf16.msra.mxu0 %v1234
    %1745 = vmatpush.bf16.msra.mxu0 %v1232
    %1746 = vmatpush.bf16.msra.mxu0 %v1230
    %1747 = vmatmul.bf16.gmra.mxu0 %v413
    %v1748 = vpop.f32.mrf.mxu0
    %v1749 = vadd.f32 %v1736, %v1748
    %v1750 = vpop.f32.mrf.mxu0
    %1751 = vdwg.mxu0
    %1752 = vmatpush.bf16.msra.mxu0 %v1260
    %1753 = vmatpush.bf16.msra.mxu0 %v1258
    %1754 = vmatpush.bf16.msra.mxu0 %v1256
    %1755 = vmatpush.bf16.msra.mxu0 %v1254
    %1756 = vmatpush.bf16.msra.mxu0 %v1252
    %1757 = vmatpush.bf16.msra.mxu0 %v1250
    %1758 = vmatpush.bf16.msra.mxu0 %v1248
    %1759 = vmatpush.bf16.msra.mxu0 %v1246
    %1760 = vmatmul.bf16.gmra.mxu0 %v414
    %v1761 = vpop.f32.mrf.mxu0
    %v1762 = vadd.f32 %v1749, %v1761
    %v1763 = vpop.f32.mrf.mxu0
    %1764 = vdwg.mxu0
    %1765 = vmatpush.bf16.msra.mxu0 %v1276
    %1766 = vmatpush.bf16.msra.mxu0 %v1274
    %1767 = vmatpush.bf16.msra.mxu0 %v1272
    %1768 = vmatpush.bf16.msra.mxu0 %v1270
    %1769 = vmatpush.bf16.msra.mxu0 %v1268
    %1770 = vmatpush.bf16.msra.mxu0 %v1266
    %1771 = vmatpush.bf16.msra.mxu0 %v1264
    %1772 = vmatpush.bf16.msra.mxu0 %v1262
    %1773 = vmatmul.bf16.gmra.mxu0 %v415
    %v1774 = vpop.f32.mrf.mxu0
    %v1775 = vadd.f32 %v1762, %v1774
    %v1776 = vpop.f32.mrf.mxu0
    %1777 = vdwg.mxu0
    %1778 = vmatpush.bf16.msra.mxu0 %v1292
    %1779 = vmatpush.bf16.msra.mxu0 %v1290
    %1780 = vmatpush.bf16.msra.mxu0 %v1288
    %1781 = vmatpush.bf16.msra.mxu0 %v1286
    %1782 = vmatpush.bf16.msra.mxu0 %v1284
    %1783 = vmatpush.bf16.msra.mxu0 %v1282
    %1784 = vmatpush.bf16.msra.mxu0 %v1280
    %1785 = vmatpush.bf16.msra.mxu0 %v1278
    %1786 = vmatmul.bf16.gmra.mxu0 %v416
    %v1787 = vpop.f32.mrf.mxu0
    %v1788 = vadd.f32 %v1775, %v1787
    %v1789 = vpop.f32.mrf.mxu0
    %1790 = vdwg.mxu0
    %1791 = vmatpush.bf16.msra.mxu0 %v1308
    %1792 = vmatpush.bf16.msra.mxu0 %v1306
    %1793 = vmatpush.bf16.msra.mxu0 %v1304
    %1794 = vmatpush.bf16.msra.mxu0 %v1302
    %1795 = vmatpush.bf16.msra.mxu0 %v1300
    %1796 = vmatpush.bf16.msra.mxu0 %v1298
    %1797 = vmatpush.bf16.msra.mxu0 %v1296
    %1798 = vmatpush.bf16.msra.mxu0 %v1294
    %1799 = vmatmul.bf16.gmra.mxu0 %v417
    %v1800 = vpop.f32.mrf.mxu0
    %v1801 = vadd.f32 %v1788, %v1800
    %v1802 = vpop.f32.mrf.mxu0
    %1803 = vdwg.mxu0
    %1804 = vmatpush.bf16.msra.mxu0 %v1324
    %1805 = vmatpush.bf16.msra.mxu0 %v1322
    %1806 = vmatpush.bf16.msra.mxu0 %v1320
    %1807 = vmatpush.bf16.msra.mxu0 %v1318
    %1808 = vmatpush.bf16.msra.mxu0 %v1316
    %1809 = vmatpush.bf16.msra.mxu0 %v1314
    %1810 = vmatpush.bf16.msra.mxu0 %v1312
    %1811 = vmatpush.bf16.msra.mxu0 %v1310
    %1812 = vmatmul.bf16.gmra.mxu0 %v418
    %v1813 = vpop.f32.mrf.mxu0
    %v1814 = vadd.f32 %v1801, %v1813
    %v1815 = vpop.f32.mrf.mxu0
    %1816 = vdwg.mxu0
    %1817 = vmatpush.bf16.msra.mxu0 %v1340
    %1818 = vmatpush.bf16.msra.mxu0 %v1338
    %1819 = vmatpush.bf16.msra.mxu0 %v1336
    %1820 = vmatpush.bf16.msra.mxu0 %v1334
    %1821 = vmatpush.bf16.msra.mxu0 %v1332
    %1822 = vmatpush.bf16.msra.mxu0 %v1330
    %1823 = vmatpush.bf16.msra.mxu0 %v1328
    %1824 = vmatpush.bf16.msra.mxu0 %v1326
    %1825 = vmatmul.bf16.gmra.mxu0 %v419
    %v1826 = vpop.f32.mrf.mxu0
    %v1827 = vadd.f32 %v1814, %v1826
    %v1828 = vpop.f32.mrf.mxu0
    %1829 = vdwg.mxu0
    %1830 = vmatpush.bf16.msra.mxu0 %v1356
    %1831 = vmatpush.bf16.msra.mxu0 %v1354
    %1832 = vmatpush.bf16.msra.mxu0 %v1352
    %1833 = vmatpush.bf16.msra.mxu0 %v1350
    %1834 = vmatpush.bf16.msra.mxu0 %v1348
    %1835 = vmatpush.bf16.msra.mxu0 %v1346
    %1836 = vmatpush.bf16.msra.mxu0 %v1344
    %1837 = vmatpush.bf16.msra.mxu0 %v1342
    %1838 = vmatmul.bf16.gmra.mxu0 %v422
    %v1839 = vpop.f32.mrf.mxu0
    %v1840 = vadd.f32 %v1827, %v1839
    %v1841 = vpop.f32.mrf.mxu0
    %1842 = vdwg.mxu0
    %1843 = vmatpush.bf16.msra.mxu0 %v1372
    %1844 = vmatpush.bf16.msra.mxu0 %v1370
    %1845 = vmatpush.bf16.msra.mxu0 %v1368
    %1846 = vmatpush.bf16.msra.mxu0 %v1366
    %1847 = vmatpush.bf16.msra.mxu0 %v1364
    %1848 = vmatpush.bf16.msra.mxu0 %v1362
    %1849 = vmatpush.bf16.msra.mxu0 %v1360
    %1850 = vmatpush.bf16.msra.mxu0 %v1358
    %1851 = vmatmul.bf16.gmra.mxu0 %v423
    %v1852 = vpop.f32.mrf.mxu0
    %v1853 = vadd.f32 %v1840, %v1852
    %v1854 = vpop.f32.mrf.mxu0
    %1855 = vdwg.mxu0
    %1856 = vmatpush.bf16.msra.mxu0 %v1388
    %1857 = vmatpush.bf16.msra.mxu0 %v1386
    %1858 = vmatpush.bf16.msra.mxu0 %v1384
    %1859 = vmatpush.bf16.msra.mxu0 %v1382
    %1860 = vmatpush.bf16.msra.mxu0 %v1380
    %1861 = vmatpush.bf16.msra.mxu0 %v1378
    %1862 = vmatpush.bf16.msra.mxu0 %v1376
    %1863 = vmatpush.bf16.msra.mxu0 %v1374
    %1864 = vmatmul.bf16.gmra.mxu0 %v424
    %v1865 = vpop.f32.mrf.mxu0
    %v1866 = vadd.f32 %v1853, %v1865
    %v1867 = vpop.f32.mrf.mxu0
    %1868 = vdwg.mxu0
    %1869 = vmatpush.bf16.msra.mxu0 %v1404
    %1870 = vmatpush.bf16.msra.mxu0 %v1402
    %1871 = vmatpush.bf16.msra.mxu0 %v1400
    %1872 = vmatpush.bf16.msra.mxu0 %v1398
    %1873 = vmatpush.bf16.msra.mxu0 %v1396
    %1874 = vmatpush.bf16.msra.mxu0 %v1394
    %1875 = vmatpush.bf16.msra.mxu0 %v1392
    %1876 = vmatpush.bf16.msra.mxu0 %v1390
    %1877 = vmatmul.bf16.gmra.mxu0 %v425
    %v1878 = vpop.f32.mrf.mxu0
    %v1879 = vadd.f32 %v1866, %v1878
    %v1880 = vpop.f32.mrf.mxu0
    %1881 = vdwg.mxu0
    %1882 = vmatpush.bf16.msra.mxu0 %v1420
    %1883 = vmatpush.bf16.msra.mxu0 %v1418
    %1884 = vmatpush.bf16.msra.mxu0 %v1416
    %1885 = vmatpush.bf16.msra.mxu0 %v1414
    %1886 = vmatpush.bf16.msra.mxu0 %v1412
    %1887 = vmatpush.bf16.msra.mxu0 %v1410
    %1888 = vmatpush.bf16.msra.mxu0 %v1408
    %1889 = vmatpush.bf16.msra.mxu0 %v1406
    %1890 = vmatmul.bf16.gmra.mxu0 %v426
    %v1891 = vpop.f32.mrf.mxu0
    %v1892 = vadd.f32 %v1879, %v1891
    %v1893 = vpop.f32.mrf.mxu0
    %1894 = vdwg.mxu0
    %1895 = vmatpush.bf16.msra.mxu0 %v1436
    %1896 = vmatpush.bf16.msra.mxu0 %v1434
    %1897 = vmatpush.bf16.msra.mxu0 %v1432
    %1898 = vmatpush.bf16.msra.mxu0 %v1430
    %1899 = vmatpush.bf16.msra.mxu0 %v1428
    %1900 = vmatpush.bf16.msra.mxu0 %v1426
    %1901 = vmatpush.bf16.msra.mxu0 %v1424
    %1902 = vmatpush.bf16.msra.mxu0 %v1422
    %1903 = vmatmul.bf16.gmra.mxu0 %v427
    %v1904 = vpop.f32.mrf.mxu0
    %v1905 = vadd.f32 %v1892, %v1904
    %v1906 = vpop.f32.mrf.mxu0
    %1907 = vdwg.mxu0
    %1908 = vmatpush.bf16.msra.mxu0 %v1452
    %1909 = vmatpush.bf16.msra.mxu0 %v1450
    %1910 = vmatpush.bf16.msra.mxu0 %v1448
    %1911 = vmatpush.bf16.msra.mxu0 %v1446
    %1912 = vmatpush.bf16.msra.mxu0 %v1444
    %1913 = vmatpush.bf16.msra.mxu0 %v1442
    %1914 = vmatpush.bf16.msra.mxu0 %v1440
    %1915 = vmatpush.bf16.msra.mxu0 %v1438
    %1916 = vmatmul.bf16.gmra.mxu0 %v428
    %v1917 = vpop.f32.mrf.mxu0
    %v1918 = vadd.f32 %v1905, %v1917
    %v1919 = vpop.f32.mrf.mxu0
    %1920 = vdwg.mxu0
    %1921 = vmatpush.bf16.msra.mxu0 %v1468
    %1922 = vmatpush.bf16.msra.mxu0 %v1466
    %1923 = vmatpush.bf16.msra.mxu0 %v1464
    %1924 = vmatpush.bf16.msra.mxu0 %v1462
    %1925 = vmatpush.bf16.msra.mxu0 %v1460
    %1926 = vmatpush.bf16.msra.mxu0 %v1458
    %1927 = vmatpush.bf16.msra.mxu0 %v1456
    %1928 = vmatpush.bf16.msra.mxu0 %v1454
    %1929 = vmatmul.bf16.gmra.mxu0 %v429
    %v1930 = vpop.f32.mrf.mxu0
    %v1931 = vadd.f32 %v1918, %v1930
    %v1932 = vpop.f32.mrf.mxu0
    %1933 = vdwg.mxu0
    %1934 = vmatpush.bf16.msra.mxu0 %v1229
    %1935 = vmatpush.bf16.msra.mxu0 %v1227
    %1936 = vmatpush.bf16.msra.mxu0 %v1225
    %1937 = vmatpush.bf16.msra.mxu0 %v1223
    %1938 = vmatpush.bf16.msra.mxu0 %v1221
    %1939 = vmatpush.bf16.msra.mxu0 %v1219
    %1940 = vmatpush.bf16.msra.mxu0 %v1217
    %1941 = vmatpush.bf16.msra.mxu0 %v1215
    %1942 = vmatmul.bf16.gmra.mxu0 %v412
    %v1943 = vpop.f32.mrf.mxu0
    %v1944 = vadd.f32 0.0, %v1943
    %v1945 = vpop.f32.mrf.mxu0
    %1946 = vdwg.mxu0
    %1947 = vmatpush.bf16.msra.mxu0 %v1245
    %1948 = vmatpush.bf16.msra.mxu0 %v1243
    %1949 = vmatpush.bf16.msra.mxu0 %v1241
    %1950 = vmatpush.bf16.msra.mxu0 %v1239
    %1951 = vmatpush.bf16.msra.mxu0 %v1237
    %1952 = vmatpush.bf16.msra.mxu0 %v1235
    %1953 = vmatpush.bf16.msra.mxu0 %v1233
    %1954 = vmatpush.bf16.msra.mxu0 %v1231
    %1955 = vmatmul.bf16.gmra.mxu0 %v413
    %v1956 = vpop.f32.mrf.mxu0
    %v1957 = vadd.f32 %v1944, %v1956
    %v1958 = vpop.f32.mrf.mxu0
    %1959 = vdwg.mxu0
    %1960 = vmatpush.bf16.msra.mxu0 %v1261
    %1961 = vmatpush.bf16.msra.mxu0 %v1259
    %1962 = vmatpush.bf16.msra.mxu0 %v1257
    %1963 = vmatpush.bf16.msra.mxu0 %v1255
    %1964 = vmatpush.bf16.msra.mxu0 %v1253
    %1965 = vmatpush.bf16.msra.mxu0 %v1251
    %1966 = vmatpush.bf16.msra.mxu0 %v1249
    %1967 = vmatpush.bf16.msra.mxu0 %v1247
    %1968 = vmatmul.bf16.gmra.mxu0 %v414
    %v1969 = vpop.f32.mrf.mxu0
    %v1970 = vadd.f32 %v1957, %v1969
    %v1971 = vpop.f32.mrf.mxu0
    %1972 = vdwg.mxu0
    %1973 = vmatpush.bf16.msra.mxu0 %v1277
    %1974 = vmatpush.bf16.msra.mxu0 %v1275
    %1975 = vmatpush.bf16.msra.mxu0 %v1273
    %1976 = vmatpush.bf16.msra.mxu0 %v1271
    %1977 = vmatpush.bf16.msra.mxu0 %v1269
    %1978 = vmatpush.bf16.msra.mxu0 %v1267
    %1979 = vmatpush.bf16.msra.mxu0 %v1265
    %1980 = vmatpush.bf16.msra.mxu0 %v1263
    %1981 = vmatmul.bf16.gmra.mxu0 %v415
    %v1982 = vpop.f32.mrf.mxu0
    %v1983 = vadd.f32 %v1970, %v1982
    %v1984 = vpop.f32.mrf.mxu0
    %1985 = vdwg.mxu0
    %1986 = vmatpush.bf16.msra.mxu0 %v1293
    %1987 = vmatpush.bf16.msra.mxu0 %v1291
    %1988 = vmatpush.bf16.msra.mxu0 %v1289
    %1989 = vmatpush.bf16.msra.mxu0 %v1287
    %1990 = vmatpush.bf16.msra.mxu0 %v1285
    %1991 = vmatpush.bf16.msra.mxu0 %v1283
    %1992 = vmatpush.bf16.msra.mxu0 %v1281
    %1993 = vmatpush.bf16.msra.mxu0 %v1279
    %1994 = vmatmul.bf16.gmra.mxu0 %v416
    %v1995 = vpop.f32.mrf.mxu0
    %v1996 = vadd.f32 %v1983, %v1995
    %v1997 = vpop.f32.mrf.mxu0
    %1998 = vdwg.mxu0
    %1999 = vmatpush.bf16.msra.mxu0 %v1309
    %2000 = vmatpush.bf16.msra.mxu0 %v1307
    %2001 = vmatpush.bf16.msra.mxu0 %v1305
    %2002 = vmatpush.bf16.msra.mxu0 %v1303
    %2003 = vmatpush.bf16.msra.mxu0 %v1301
    %2004 = vmatpush.bf16.msra.mxu0 %v1299
    %2005 = vmatpush.bf16.msra.mxu0 %v1297
    %2006 = vmatpush.bf16.msra.mxu0 %v1295
    %2007 = vmatmul.bf16.gmra.mxu0 %v417
    %v2008 = vpop.f32.mrf.mxu0
    %v2009 = vadd.f32 %v1996, %v2008
    %v2010 = vpop.f32.mrf.mxu0
    %2011 = vdwg.mxu0
    %2012 = vmatpush.bf16.msra.mxu0 %v1325
    %2013 = vmatpush.bf16.msra.mxu0 %v1323
    %2014 = vmatpush.bf16.msra.mxu0 %v1321
    %2015 = vmatpush.bf16.msra.mxu0 %v1319
    %2016 = vmatpush.bf16.msra.mxu0 %v1317
    %2017 = vmatpush.bf16.msra.mxu0 %v1315
    %2018 = vmatpush.bf16.msra.mxu0 %v1313
    %2019 = vmatpush.bf16.msra.mxu0 %v1311
    %2020 = vmatmul.bf16.gmra.mxu0 %v418
    %v2021 = vpop.f32.mrf.mxu0
    %v2022 = vadd.f32 %v2009, %v2021
    %v2023 = vpop.f32.mrf.mxu0
    %2024 = vdwg.mxu0
    %2025 = vmatpush.bf16.msra.mxu0 %v1341
    %2026 = vmatpush.bf16.msra.mxu0 %v1339
    %2027 = vmatpush.bf16.msra.mxu0 %v1337
    %2028 = vmatpush.bf16.msra.mxu0 %v1335
    %2029 = vmatpush.bf16.msra.mxu0 %v1333
    %2030 = vmatpush.bf16.msra.mxu0 %v1331
    %2031 = vmatpush.bf16.msra.mxu0 %v1329
    %2032 = vmatpush.bf16.msra.mxu0 %v1327
    %2033 = vmatmul.bf16.gmra.mxu0 %v419
    %v2034 = vpop.f32.mrf.mxu0
    %v2035 = vadd.f32 %v2022, %v2034
    %v2036 = vpop.f32.mrf.mxu0
    %2037 = vdwg.mxu0
    %2038 = vmatpush.bf16.msra.mxu0 %v1357
    %2039 = vmatpush.bf16.msra.mxu0 %v1355
    %2040 = vmatpush.bf16.msra.mxu0 %v1353
    %2041 = vmatpush.bf16.msra.mxu0 %v1351
    %2042 = vmatpush.bf16.msra.mxu0 %v1349
    %2043 = vmatpush.bf16.msra.mxu0 %v1347
    %2044 = vmatpush.bf16.msra.mxu0 %v1345
    %2045 = vmatpush.bf16.msra.mxu0 %v1343
    %2046 = vmatmul.bf16.gmra.mxu0 %v422
    %v2047 = vpop.f32.mrf.mxu0
    %v2048 = vadd.f32 %v2035, %v2047
    %v2049 = vpop.f32.mrf.mxu0
    %2050 = vdwg.mxu0
    %2051 = vmatpush.bf16.msra.mxu0 %v1373
    %2052 = vmatpush.bf16.msra.mxu0 %v1371
    %2053 = vmatpush.bf16.msra.mxu0 %v1369
    %2054 = vmatpush.bf16.msra.mxu0 %v1367
    %2055 = vmatpush.bf16.msra.mxu0 %v1365
    %2056 = vmatpush.bf16.msra.mxu0 %v1363
    %2057 = vmatpush.bf16.msra.mxu0 %v1361
    %2058 = vmatpush.bf16.msra.mxu0 %v1359
    %2059 = vmatmul.bf16.gmra.mxu0 %v423
    %v2060 = vpop.f32.mrf.mxu0
    %v2061 = vadd.f32 %v2048, %v2060
    %v2062 = vpop.f32.mrf.mxu0
    %2063 = vdwg.mxu0
    %2064 = vmatpush.bf16.msra.mxu0 %v1389
    %2065 = vmatpush.bf16.msra.mxu0 %v1387
    %2066 = vmatpush.bf16.msra.mxu0 %v1385
    %2067 = vmatpush.bf16.msra.mxu0 %v1383
    %2068 = vmatpush.bf16.msra.mxu0 %v1381
    %2069 = vmatpush.bf16.msra.mxu0 %v1379
    %2070 = vmatpush.bf16.msra.mxu0 %v1377
    %2071 = vmatpush.bf16.msra.mxu0 %v1375
    %2072 = vmatmul.bf16.gmra.mxu0 %v424
    %v2073 = vpop.f32.mrf.mxu0
    %v2074 = vadd.f32 %v2061, %v2073
    %v2075 = vpop.f32.mrf.mxu0
    %2076 = vdwg.mxu0
    %2077 = vmatpush.bf16.msra.mxu0 %v1405
    %2078 = vmatpush.bf16.msra.mxu0 %v1403
    %2079 = vmatpush.bf16.msra.mxu0 %v1401
    %2080 = vmatpush.bf16.msra.mxu0 %v1399
    %2081 = vmatpush.bf16.msra.mxu0 %v1397
    %2082 = vmatpush.bf16.msra.mxu0 %v1395
    %2083 = vmatpush.bf16.msra.mxu0 %v1393
    %2084 = vmatpush.bf16.msra.mxu0 %v1391
    %2085 = vmatmul.bf16.gmra.mxu0 %v425
    %v2086 = vpop.f32.mrf.mxu0
    %v2087 = vadd.f32 %v2074, %v2086
    %v2088 = vpop.f32.mrf.mxu0
    %2089 = vdwg.mxu0
    %2090 = vmatpush.bf16.msra.mxu0 %v1421
    %2091 = vmatpush.bf16.msra.mxu0 %v1419
    %2092 = vmatpush.bf16.msra.mxu0 %v1417
    %2093 = vmatpush.bf16.msra.mxu0 %v1415
    %2094 = vmatpush.bf16.msra.mxu0 %v1413
    %2095 = vmatpush.bf16.msra.mxu0 %v1411
    %2096 = vmatpush.bf16.msra.mxu0 %v1409
    %2097 = vmatpush.bf16.msra.mxu0 %v1407
    %2098 = vmatmul.bf16.gmra.mxu0 %v426
    %v2099 = vpop.f32.mrf.mxu0
    %v2100 = vadd.f32 %v2087, %v2099
    %v2101 = vpop.f32.mrf.mxu0
    %2102 = vdwg.mxu0
    %2103 = vmatpush.bf16.msra.mxu0 %v1437
    %2104 = vmatpush.bf16.msra.mxu0 %v1435
    %2105 = vmatpush.bf16.msra.mxu0 %v1433
    %2106 = vmatpush.bf16.msra.mxu0 %v1431
    %2107 = vmatpush.bf16.msra.mxu0 %v1429
    %2108 = vmatpush.bf16.msra.mxu0 %v1427
    %2109 = vmatpush.bf16.msra.mxu0 %v1425
    %2110 = vmatpush.bf16.msra.mxu0 %v1423
    %2111 = vmatmul.bf16.gmra.mxu0 %v427
    %v2112 = vpop.f32.mrf.mxu0
    %v2113 = vadd.f32 %v2100, %v2112
    %v2114 = vpop.f32.mrf.mxu0
    %2115 = vdwg.mxu0
    %2116 = vmatpush.bf16.msra.mxu0 %v1453
    %2117 = vmatpush.bf16.msra.mxu0 %v1451
    %2118 = vmatpush.bf16.msra.mxu0 %v1449
    %2119 = vmatpush.bf16.msra.mxu0 %v1447
    %2120 = vmatpush.bf16.msra.mxu0 %v1445
    %2121 = vmatpush.bf16.msra.mxu0 %v1443
    %2122 = vmatpush.bf16.msra.mxu0 %v1441
    %2123 = vmatpush.bf16.msra.mxu0 %v1439
    %2124 = vmatmul.bf16.gmra.mxu0 %v428
    %v2125 = vpop.f32.mrf.mxu0
    %v2126 = vadd.f32 %v2113, %v2125
    %v2127 = vpop.f32.mrf.mxu0
    %2128 = vdwg.mxu0
    %2129 = vmatpush.bf16.msra.mxu0 %v1469
    %2130 = vmatpush.bf16.msra.mxu0 %v1467
    %2131 = vmatpush.bf16.msra.mxu0 %v1465
    %2132 = vmatpush.bf16.msra.mxu0 %v1463
    %2133 = vmatpush.bf16.msra.mxu0 %v1461
    %2134 = vmatpush.bf16.msra.mxu0 %v1459
    %2135 = vmatpush.bf16.msra.mxu0 %v1457
    %2136 = vmatpush.bf16.msra.mxu0 %v1455
    %2137 = vmatmul.bf16.gmra.mxu0 %v429
    %v2138 = vpop.f32.mrf.mxu0
    %v2139 = vadd.f32 %v2126, %v2138
    %v2140 = vpop.f32.mrf.mxu0
    %2141 = vdwg.mxu0
    %v2142 = vld [vmem:[#allocation5] sm:$0x3f]
    %v2143 = vld [vmem:[#allocation8] sm:$0xff]
    %v2144 = vld [vmem:[#allocation8 + $0x8] sm:$0xff]
    %v2145 = vld [vmem:[#allocation8 + $0x10] sm:$0xff]
    %v2146 = vld [vmem:[#allocation8 + $0x18] sm:$0xff]
    %v2147 = vld [vmem:[#allocation8 + $0x20] sm:$0xff]
    %v2148 = vld [vmem:[#allocation8 + $0x28] sm:$0xff]
    %v2149 = vld [vmem:[#allocation8 + $0x30] sm:$0xff]
    %v2150 = vld [vmem:[#allocation8 + $0x38] sm:$0xff]
    %v2151 = vld [vmem:[#allocation8 + $0x40] sm:$0xff]
    %v2152 = vld [vmem:[#allocation8 + $0x48] sm:$0xff]
    %v2153 = vld [vmem:[#allocation8 + $0x50] sm:$0xff]
    %v2154 = vld [vmem:[#allocation8 + $0x58] sm:$0xff]
    %v2155 = vld [vmem:[#allocation8 + $0x60] sm:$0xff]
    %v2156 = vld [vmem:[#allocation8 + $0x68] sm:$0xff]
    %v2157 = vld [vmem:[#allocation8 + $0x70] sm:$0xff]
    %v2158 = vld [vmem:[#allocation8 + $0x78] sm:$0xff]
    %v2159 = vld [vmem:[#allocation8 + $0x80] sm:$0xff]
    %v2160 = vld [vmem:[#allocation8 + $0x88] sm:$0xff]
    %v2161 = vld [vmem:[#allocation8 + $0x90] sm:$0xff]
    %v2162 = vld [vmem:[#allocation8 + $0x98] sm:$0xff]
    %v2163 = vld [vmem:[#allocation8 + $0xa0] sm:$0xff]
    %v2164 = vld [vmem:[#allocation8 + $0xa8] sm:$0xff]
    %v2165 = vld [vmem:[#allocation8 + $0xb0] sm:$0xff]
    %v2166 = vld [vmem:[#allocation8 + $0xb8] sm:$0xff]
    %v2167 = vld [vmem:[#allocation8 + $0xc0] sm:$0xff]
    %v2168 = vld [vmem:[#allocation8 + $0xc8] sm:$0xff]
    %v2169 = vld [vmem:[#allocation8 + $0xd0] sm:$0xff]
    %v2170 = vld [vmem:[#allocation8 + $0xd8] sm:$0xff]
    %v2171 = vld [vmem:[#allocation8 + $0xe0] sm:$0xff]
    %v2172 = vld [vmem:[#allocation8 + $0xe8] sm:$0xff]
    %v2173 = vld [vmem:[#allocation8 + $0xf0] sm:$0xff]
    %v2174 = vld [vmem:[#allocation8 + $0xf8] sm:$0xff]
    %v2175 = vld [vmem:[#allocation8 + $0x100] sm:$0xff]
    %v2176 = vld [vmem:[#allocation8 + $0x108] sm:$0xff]
    %v2177 = vld [vmem:[#allocation8 + $0x110] sm:$0xff]
    %v2178 = vld [vmem:[#allocation8 + $0x118] sm:$0xff]
    %v2179 = vld [vmem:[#allocation8 + $0x120] sm:$0xff]
    %v2180 = vld [vmem:[#allocation8 + $0x128] sm:$0xff]
    %v2181 = vld [vmem:[#allocation8 + $0x130] sm:$0xff]
    %v2182 = vld [vmem:[#allocation8 + $0x138] sm:$0xff]
    %v2183 = vld [vmem:[#allocation8 + $0x140] sm:$0xff]
    %v2184 = vld [vmem:[#allocation8 + $0x148] sm:$0xff]
    %v2185 = vld [vmem:[#allocation8 + $0x150] sm:$0xff]
    %v2186 = vld [vmem:[#allocation8 + $0x158] sm:$0xff]
    %v2187 = vld [vmem:[#allocation8 + $0x160] sm:$0xff]
    %v2188 = vld [vmem:[#allocation8 + $0x168] sm:$0xff]
    %v2189 = vld [vmem:[#allocation8 + $0x170] sm:$0xff]
    %v2190 = vld [vmem:[#allocation8 + $0x178] sm:$0xff]
    %v2191 = vld [vmem:[#allocation8 + $0x180] sm:$0xff]
    %v2192 = vld [vmem:[#allocation8 + $0x188] sm:$0xff]
    %v2193 = vld [vmem:[#allocation8 + $0x190] sm:$0xff]
    %v2194 = vld [vmem:[#allocation8 + $0x198] sm:$0xff]
    %v2195 = vld [vmem:[#allocation8 + $0x1a0] sm:$0xff]
    %v2196 = vld [vmem:[#allocation8 + $0x1a8] sm:$0xff]
    %v2197 = vld [vmem:[#allocation8 + $0x1b0] sm:$0xff]
    %v2198 = vld [vmem:[#allocation8 + $0x1b8] sm:$0xff]
    %v2199 = vld [vmem:[#allocation8 + $0x1c0] sm:$0xff]
    %v2200 = vld [vmem:[#allocation8 + $0x1c8] sm:$0xff]
    %v2201 = vld [vmem:[#allocation8 + $0x1d0] sm:$0xff]
    %v2202 = vld [vmem:[#allocation8 + $0x1d8] sm:$0xff]
    %v2203 = vld [vmem:[#allocation8 + $0x1e0] sm:$0xff]
    %v2204 = vld [vmem:[#allocation8 + $0x1e8] sm:$0xff]
    %v2205 = vld [vmem:[#allocation8 + $0x1f0] sm:$0xff]
    %v2206 = vld [vmem:[#allocation8 + $0x1f8] sm:$0xff]
    %v2207 = vld [vmem:[#allocation8 + $0x200] sm:$0xff]
    %v2208 = vld [vmem:[#allocation8 + $0x208] sm:$0xff]
    %v2209 = vld [vmem:[#allocation8 + $0x210] sm:$0xff]
    %v2210 = vld [vmem:[#allocation8 + $0x218] sm:$0xff]
    %v2211 = vld [vmem:[#allocation8 + $0x220] sm:$0xff]
    %v2212 = vld [vmem:[#allocation8 + $0x228] sm:$0xff]
    %v2213 = vld [vmem:[#allocation8 + $0x230] sm:$0xff]
    %v2214 = vld [vmem:[#allocation8 + $0x238] sm:$0xff]
    %v2215 = vld [vmem:[#allocation8 + $0x240] sm:$0xff]
    %v2216 = vld [vmem:[#allocation8 + $0x248] sm:$0xff]
    %v2217 = vld [vmem:[#allocation8 + $0x250] sm:$0xff]
    %v2218 = vld [vmem:[#allocation8 + $0x258] sm:$0xff]
    %v2219 = vld [vmem:[#allocation8 + $0x260] sm:$0xff]
    %v2220 = vld [vmem:[#allocation8 + $0x268] sm:$0xff]
    %v2221 = vld [vmem:[#allocation8 + $0x270] sm:$0xff]
    %v2222 = vld [vmem:[#allocation8 + $0x278] sm:$0xff]
    %v2223 = vld [vmem:[#allocation8 + $0x280] sm:$0xff]
    %v2224 = vld [vmem:[#allocation8 + $0x288] sm:$0xff]
    %v2225 = vld [vmem:[#allocation8 + $0x290] sm:$0xff]
    %v2226 = vld [vmem:[#allocation8 + $0x298] sm:$0xff]
    %v2227 = vld [vmem:[#allocation8 + $0x2a0] sm:$0xff]
    %v2228 = vld [vmem:[#allocation8 + $0x2a8] sm:$0xff]
    %v2229 = vld [vmem:[#allocation8 + $0x2b0] sm:$0xff]
    %v2230 = vld [vmem:[#allocation8 + $0x2b8] sm:$0xff]
    %v2231 = vld [vmem:[#allocation8 + $0x2c0] sm:$0xff]
    %v2232 = vld [vmem:[#allocation8 + $0x2c8] sm:$0xff]
    %v2233 = vld [vmem:[#allocation8 + $0x2d0] sm:$0xff]
    %v2234 = vld [vmem:[#allocation8 + $0x2d8] sm:$0xff]
    %v2235 = vld [vmem:[#allocation8 + $0x2e0] sm:$0xff]
    %v2236 = vld [vmem:[#allocation8 + $0x2e8] sm:$0xff]
    %v2237 = vld [vmem:[#allocation8 + $0x2f0] sm:$0xff]
    %v2238 = vld [vmem:[#allocation8 + $0x2f8] sm:$0xff]
    %2240 = vst [vmem:[#allocation1] ss:$9 sm:$0xff] %v2142
    %v2241 = vld [vmem:[#allocation1] sm:$0xff]
    %v2242 = vld [vmem:[#allocation1 + $0x9] sm:$0xff]
    %v2243 = vld [vmem:[#allocation1 + $0x12] sm:$0xff]
    %v2244 = vld [vmem:[#allocation1 + $0x1b] sm:$0xff]
    %v2245 = vld [vmem:[#allocation1 + $0x24] sm:$0xff]
    %v2246 = vld [vmem:[#allocation1 + $0x2d] sm:$0xff]
    %v2349 = vunpack.c.l.b16 %v2143
    %v2350 = vunpack.c.h.b16 %v2143
    %v2351 = vunpack.c.l.b16 %v2144
    %v2352 = vunpack.c.h.b16 %v2144
    %v2353 = vunpack.c.l.b16 %v2145
    %v2354 = vunpack.c.h.b16 %v2145
    %v2355 = vunpack.c.l.b16 %v2146
    %v2356 = vunpack.c.h.b16 %v2146
    %v2357 = vunpack.c.l.b16 %v2147
    %v2358 = vunpack.c.h.b16 %v2147
    %v2359 = vunpack.c.l.b16 %v2148
    %v2360 = vunpack.c.h.b16 %v2148
    %v2361 = vunpack.c.l.b16 %v2149
    %v2362 = vunpack.c.h.b16 %v2149
    %v2363 = vunpack.c.l.b16 %v2150
    %v2364 = vunpack.c.h.b16 %v2150
    %v2365 = vunpack.c.l.b16 %v2151
    %v2366 = vunpack.c.h.b16 %v2151
    %v2367 = vunpack.c.l.b16 %v2152
    %v2368 = vunpack.c.h.b16 %v2152
    %v2369 = vunpack.c.l.b16 %v2153
    %v2370 = vunpack.c.h.b16 %v2153
    %v2371 = vunpack.c.l.b16 %v2154
    %v2372 = vunpack.c.h.b16 %v2154
    %v2373 = vunpack.c.l.b16 %v2155
    %v2374 = vunpack.c.h.b16 %v2155
    %v2375 = vunpack.c.l.b16 %v2156
    %v2376 = vunpack.c.h.b16 %v2156
    %v2377 = vunpack.c.l.b16 %v2157
    %v2378 = vunpack.c.h.b16 %v2157
    %v2379 = vunpack.c.l.b16 %v2158
    %v2380 = vunpack.c.h.b16 %v2158
    %v2381 = vunpack.c.l.b16 %v2159
    %v2382 = vunpack.c.h.b16 %v2159
    %v2383 = vunpack.c.l.b16 %v2160
    %v2384 = vunpack.c.h.b16 %v2160
    %v2385 = vunpack.c.l.b16 %v2161
    %v2386 = vunpack.c.h.b16 %v2161
    %v2387 = vunpack.c.l.b16 %v2162
    %v2388 = vunpack.c.h.b16 %v2162
    %v2389 = vunpack.c.l.b16 %v2163
    %v2390 = vunpack.c.h.b16 %v2163
    %v2391 = vunpack.c.l.b16 %v2164
    %v2392 = vunpack.c.h.b16 %v2164
    %v2393 = vunpack.c.l.b16 %v2165
    %v2394 = vunpack.c.h.b16 %v2165
    %v2395 = vunpack.c.l.b16 %v2166
    %v2396 = vunpack.c.h.b16 %v2166
    %v2397 = vunpack.c.l.b16 %v2167
    %v2398 = vunpack.c.h.b16 %v2167
    %v2399 = vunpack.c.l.b16 %v2168
    %v2400 = vunpack.c.h.b16 %v2168
    %v2401 = vunpack.c.l.b16 %v2169
    %v2402 = vunpack.c.h.b16 %v2169
    %v2403 = vunpack.c.l.b16 %v2170
    %v2404 = vunpack.c.h.b16 %v2170
    %v2405 = vunpack.c.l.b16 %v2171
    %v2406 = vunpack.c.h.b16 %v2171
    %v2407 = vunpack.c.l.b16 %v2172
    %v2408 = vunpack.c.h.b16 %v2172
    %v2409 = vunpack.c.l.b16 %v2173
    %v2410 = vunpack.c.h.b16 %v2173
    %v2411 = vunpack.c.l.b16 %v2174
    %v2412 = vunpack.c.h.b16 %v2174
    %v2413 = vunpack.c.l.b16 %v2175
    %v2414 = vunpack.c.h.b16 %v2175
    %v2415 = vunpack.c.l.b16 %v2176
    %v2416 = vunpack.c.h.b16 %v2176
    %v2417 = vunpack.c.l.b16 %v2177
    %v2418 = vunpack.c.h.b16 %v2177
    %v2419 = vunpack.c.l.b16 %v2178
    %v2420 = vunpack.c.h.b16 %v2178
    %v2421 = vunpack.c.l.b16 %v2179
    %v2422 = vunpack.c.h.b16 %v2179
    %v2423 = vunpack.c.l.b16 %v2180
    %v2424 = vunpack.c.h.b16 %v2180
    %v2425 = vunpack.c.l.b16 %v2181
    %v2426 = vunpack.c.h.b16 %v2181
    %v2427 = vunpack.c.l.b16 %v2182
    %v2428 = vunpack.c.h.b16 %v2182
    %v2429 = vunpack.c.l.b16 %v2183
    %v2430 = vunpack.c.h.b16 %v2183
    %v2431 = vunpack.c.l.b16 %v2184
    %v2432 = vunpack.c.h.b16 %v2184
    %v2433 = vunpack.c.l.b16 %v2185
    %v2434 = vunpack.c.h.b16 %v2185
    %v2435 = vunpack.c.l.b16 %v2186
    %v2436 = vunpack.c.h.b16 %v2186
    %v2437 = vunpack.c.l.b16 %v2187
    %v2438 = vunpack.c.h.b16 %v2187
    %v2439 = vunpack.c.l.b16 %v2188
    %v2440 = vunpack.c.h.b16 %v2188
    %v2441 = vunpack.c.l.b16 %v2189
    %v2442 = vunpack.c.h.b16 %v2189
    %v2443 = vunpack.c.l.b16 %v2190
    %v2444 = vunpack.c.h.b16 %v2190
    %v2445 = vunpack.c.l.b16 %v2191
    %v2446 = vunpack.c.h.b16 %v2191
    %v2447 = vunpack.c.l.b16 %v2192
    %v2448 = vunpack.c.h.b16 %v2192
    %v2449 = vunpack.c.l.b16 %v2193
    %v2450 = vunpack.c.h.b16 %v2193
    %v2451 = vunpack.c.l.b16 %v2194
    %v2452 = vunpack.c.h.b16 %v2194
    %v2453 = vunpack.c.l.b16 %v2195
    %v2454 = vunpack.c.h.b16 %v2195
    %v2455 = vunpack.c.l.b16 %v2196
    %v2456 = vunpack.c.h.b16 %v2196
    %v2457 = vunpack.c.l.b16 %v2197
    %v2458 = vunpack.c.h.b16 %v2197
    %v2459 = vunpack.c.l.b16 %v2198
    %v2460 = vunpack.c.h.b16 %v2198
    %v2461 = vunpack.c.l.b16 %v2199
    %v2462 = vunpack.c.h.b16 %v2199
    %v2463 = vunpack.c.l.b16 %v2200
    %v2464 = vunpack.c.h.b16 %v2200
    %v2465 = vunpack.c.l.b16 %v2201
    %v2466 = vunpack.c.h.b16 %v2201
    %v2467 = vunpack.c.l.b16 %v2202
    %v2468 = vunpack.c.h.b16 %v2202
    %v2469 = vunpack.c.l.b16 %v2203
    %v2470 = vunpack.c.h.b16 %v2203
    %v2471 = vunpack.c.l.b16 %v2204
    %v2472 = vunpack.c.h.b16 %v2204
    %v2473 = vunpack.c.l.b16 %v2205
    %v2474 = vunpack.c.h.b16 %v2205
    %v2475 = vunpack.c.l.b16 %v2206
    %v2476 = vunpack.c.h.b16 %v2206
    %v2477 = vunpack.c.l.b16 %v2207
    %v2478 = vunpack.c.h.b16 %v2207
    %v2479 = vunpack.c.l.b16 %v2208
    %v2480 = vunpack.c.h.b16 %v2208
    %v2481 = vunpack.c.l.b16 %v2209
    %v2482 = vunpack.c.h.b16 %v2209
    %v2483 = vunpack.c.l.b16 %v2210
    %v2484 = vunpack.c.h.b16 %v2210
    %v2485 = vunpack.c.l.b16 %v2211
    %v2486 = vunpack.c.h.b16 %v2211
    %v2487 = vunpack.c.l.b16 %v2212
    %v2488 = vunpack.c.h.b16 %v2212
    %v2489 = vunpack.c.l.b16 %v2213
    %v2490 = vunpack.c.h.b16 %v2213
    %v2491 = vunpack.c.l.b16 %v2214
    %v2492 = vunpack.c.h.b16 %v2214
    %v2493 = vunpack.c.l.b16 %v2215
    %v2494 = vunpack.c.h.b16 %v2215
    %v2495 = vunpack.c.l.b16 %v2216
    %v2496 = vunpack.c.h.b16 %v2216
    %v2497 = vunpack.c.l.b16 %v2217
    %v2498 = vunpack.c.h.b16 %v2217
    %v2499 = vunpack.c.l.b16 %v2218
    %v2500 = vunpack.c.h.b16 %v2218
    %v2501 = vunpack.c.l.b16 %v2219
    %v2502 = vunpack.c.h.b16 %v2219
    %v2503 = vunpack.c.l.b16 %v2220
    %v2504 = vunpack.c.h.b16 %v2220
    %v2505 = vunpack.c.l.b16 %v2221
    %v2506 = vunpack.c.h.b16 %v2221
    %v2507 = vunpack.c.l.b16 %v2222
    %v2508 = vunpack.c.h.b16 %v2222
    %v2509 = vunpack.c.l.b16 %v2223
    %v2510 = vunpack.c.h.b16 %v2223
    %v2511 = vunpack.c.l.b16 %v2224
    %v2512 = vunpack.c.h.b16 %v2224
    %v2513 = vunpack.c.l.b16 %v2225
    %v2514 = vunpack.c.h.b16 %v2225
    %v2515 = vunpack.c.l.b16 %v2226
    %v2516 = vunpack.c.h.b16 %v2226
    %v2517 = vunpack.c.l.b16 %v2227
    %v2518 = vunpack.c.h.b16 %v2227
    %v2519 = vunpack.c.l.b16 %v2228
    %v2520 = vunpack.c.h.b16 %v2228
    %v2521 = vunpack.c.l.b16 %v2229
    %v2522 = vunpack.c.h.b16 %v2229
    %v2523 = vunpack.c.l.b16 %v2230
    %v2524 = vunpack.c.h.b16 %v2230
    %v2525 = vunpack.c.l.b16 %v2231
    %v2526 = vunpack.c.h.b16 %v2231
    %v2527 = vunpack.c.l.b16 %v2232
    %v2528 = vunpack.c.h.b16 %v2232
    %v2529 = vunpack.c.l.b16 %v2233
    %v2530 = vunpack.c.h.b16 %v2233
    %v2531 = vunpack.c.l.b16 %v2234
    %v2532 = vunpack.c.h.b16 %v2234
    %v2533 = vunpack.c.l.b16 %v2235
    %v2534 = vunpack.c.h.b16 %v2235
    %v2535 = vunpack.c.l.b16 %v2236
    %v2536 = vunpack.c.h.b16 %v2236
    %v2537 = vunpack.c.l.b16 %v2237
    %v2538 = vunpack.c.h.b16 %v2237
    %v2539 = vunpack.c.l.b16 %v2238
    %v2540 = vunpack.c.h.b16 %v2238
    %v2541 = vpack.c.b16 %v2351, %v2349
    %v2542 = vpack.c.b16 %v2352, %v2350
    %v2543 = vpack.c.b16 %v2355, %v2353
    %v2544 = vpack.c.b16 %v2356, %v2354
    %v2545 = vpack.c.b16 %v2359, %v2357
    %v2546 = vpack.c.b16 %v2360, %v2358
    %v2547 = vpack.c.b16 %v2363, %v2361
    %v2548 = vpack.c.b16 %v2364, %v2362
    %v2549 = vpack.c.b16 %v2367, %v2365
    %v2550 = vpack.c.b16 %v2368, %v2366
    %v2551 = vpack.c.b16 %v2371, %v2369
    %v2552 = vpack.c.b16 %v2372, %v2370
    %v2553 = vpack.c.b16 %v2375, %v2373
    %v2554 = vpack.c.b16 %v2376, %v2374
    %v2555 = vpack.c.b16 %v2379, %v2377
    %v2556 = vpack.c.b16 %v2380, %v2378
    %v2557 = vpack.c.b16 %v2383, %v2381
    %v2558 = vpack.c.b16 %v2384, %v2382
    %v2559 = vpack.c.b16 %v2387, %v2385
    %v2560 = vpack.c.b16 %v2388, %v2386
    %v2561 = vpack.c.b16 %v2391, %v2389
    %v2562 = vpack.c.b16 %v2392, %v2390
    %v2563 = vpack.c.b16 %v2395, %v2393
    %v2564 = vpack.c.b16 %v2396, %v2394
    %v2565 = vpack.c.b16 %v2399, %v2397
    %v2566 = vpack.c.b16 %v2400, %v2398
    %v2567 = vpack.c.b16 %v2403, %v2401
    %v2568 = vpack.c.b16 %v2404, %v2402
    %v2569 = vpack.c.b16 %v2407, %v2405
    %v2570 = vpack.c.b16 %v2408, %v2406
    %v2571 = vpack.c.b16 %v2411, %v2409
    %v2572 = vpack.c.b16 %v2412, %v2410
    %v2573 = vpack.c.b16 %v2415, %v2413
    %v2574 = vpack.c.b16 %v2416, %v2414
    %v2575 = vpack.c.b16 %v2419, %v2417
    %v2576 = vpack.c.b16 %v2420, %v2418
    %v2577 = vpack.c.b16 %v2423, %v2421
    %v2578 = vpack.c.b16 %v2424, %v2422
    %v2579 = vpack.c.b16 %v2427, %v2425
    %v2580 = vpack.c.b16 %v2428, %v2426
    %v2581 = vpack.c.b16 %v2431, %v2429
    %v2582 = vpack.c.b16 %v2432, %v2430
    %v2583 = vpack.c.b16 %v2435, %v2433
    %v2584 = vpack.c.b16 %v2436, %v2434
    %v2585 = vpack.c.b16 %v2439, %v2437
    %v2586 = vpack.c.b16 %v2440, %v2438
    %v2587 = vpack.c.b16 %v2443, %v2441
    %v2588 = vpack.c.b16 %v2444, %v2442
    %v2589 = vpack.c.b16 %v2447, %v2445
    %v2590 = vpack.c.b16 %v2448, %v2446
    %v2591 = vpack.c.b16 %v2451, %v2449
    %v2592 = vpack.c.b16 %v2452, %v2450
    %v2593 = vpack.c.b16 %v2455, %v2453
    %v2594 = vpack.c.b16 %v2456, %v2454
    %v2595 = vpack.c.b16 %v2459, %v2457
    %v2596 = vpack.c.b16 %v2460, %v2458
    %v2597 = vpack.c.b16 %v2463, %v2461
    %v2598 = vpack.c.b16 %v2464, %v2462
    %v2599 = vpack.c.b16 %v2467, %v2465
    %v2600 = vpack.c.b16 %v2468, %v2466
    %v2601 = vpack.c.b16 %v2471, %v2469
    %v2602 = vpack.c.b16 %v2472, %v2470
    %v2603 = vpack.c.b16 %v2475, %v2473
    %v2604 = vpack.c.b16 %v2476, %v2474
    %v2605 = vpack.c.b16 %v2479, %v2477
    %v2606 = vpack.c.b16 %v2480, %v2478
    %v2607 = vpack.c.b16 %v2483, %v2481
    %v2608 = vpack.c.b16 %v2484, %v2482
    %v2609 = vpack.c.b16 %v2487, %v2485
    %v2610 = vpack.c.b16 %v2488, %v2486
    %v2611 = vpack.c.b16 %v2491, %v2489
    %v2612 = vpack.c.b16 %v2492, %v2490
    %v2613 = vpack.c.b16 %v2495, %v2493
    %v2614 = vpack.c.b16 %v2496, %v2494
    %v2615 = vpack.c.b16 %v2499, %v2497
    %v2616 = vpack.c.b16 %v2500, %v2498
    %v2617 = vpack.c.b16 %v2503, %v2501
    %v2618 = vpack.c.b16 %v2504, %v2502
    %v2619 = vpack.c.b16 %v2507, %v2505
    %v2620 = vpack.c.b16 %v2508, %v2506
    %v2621 = vpack.c.b16 %v2511, %v2509
    %v2622 = vpack.c.b16 %v2512, %v2510
    %v2623 = vpack.c.b16 %v2515, %v2513
    %v2624 = vpack.c.b16 %v2516, %v2514
    %v2625 = vpack.c.b16 %v2519, %v2517
    %v2626 = vpack.c.b16 %v2520, %v2518
    %v2627 = vpack.c.b16 %v2523, %v2521
    %v2628 = vpack.c.b16 %v2524, %v2522
    %v2629 = vpack.c.b16 %v2527, %v2525
    %v2630 = vpack.c.b16 %v2528, %v2526
    %v2631 = vpack.c.b16 %v2531, %v2529
    %v2632 = vpack.c.b16 %v2532, %v2530
    %v2633 = vpack.c.b16 %v2535, %v2533
    %v2634 = vpack.c.b16 %v2536, %v2534
    %v2635 = vpack.c.b16 %v2539, %v2537
    %v2636 = vpack.c.b16 %v2540, %v2538
    %2733 = vmatpush.bf16.msra.mxu0 %v2555
    %2734 = vmatpush.bf16.msra.mxu0 %v2553
    %2735 = vmatpush.bf16.msra.mxu0 %v2551
    %2736 = vmatpush.bf16.msra.mxu0 %v2549
    %2737 = vmatpush.bf16.msra.mxu0 %v2547
    %2738 = vmatpush.bf16.msra.mxu0 %v2545
    %2739 = vmatpush.bf16.msra.mxu0 %v2543
    %2740 = vmatpush.bf16.msra.mxu0 %v2541
    %2741 = vmatmul.bf16.gmra.mxu0 %v2241
    %v2742 = vpop.f32.mrf.mxu0
    %v2743 = vadd.f32 0.0, %v2742
    %v2744 = vpop.f32.mrf.mxu0
    %2745 = vdwg.mxu0
    %2746 = vmatpush.bf16.msra.mxu0 %v2571
    %2747 = vmatpush.bf16.msra.mxu0 %v2569
    %2748 = vmatpush.bf16.msra.mxu0 %v2567
    %2749 = vmatpush.bf16.msra.mxu0 %v2565
    %2750 = vmatpush.bf16.msra.mxu0 %v2563
    %2751 = vmatpush.bf16.msra.mxu0 %v2561
    %2752 = vmatpush.bf16.msra.mxu0 %v2559
    %2753 = vmatpush.bf16.msra.mxu0 %v2557
    %2754 = vmatmul.bf16.gmra.mxu0 %v2242
    %v2755 = vpop.f32.mrf.mxu0
    %v2756 = vadd.f32 %v2743, %v2755
    %v2757 = vpop.f32.mrf.mxu0
    %2758 = vdwg.mxu0
    %2759 = vmatpush.bf16.msra.mxu0 %v2587
    %2760 = vmatpush.bf16.msra.mxu0 %v2585
    %2761 = vmatpush.bf16.msra.mxu0 %v2583
    %2762 = vmatpush.bf16.msra.mxu0 %v2581
    %2763 = vmatpush.bf16.msra.mxu0 %v2579
    %2764 = vmatpush.bf16.msra.mxu0 %v2577
    %2765 = vmatpush.bf16.msra.mxu0 %v2575
    %2766 = vmatpush.bf16.msra.mxu0 %v2573
    %2767 = vmatmul.bf16.gmra.mxu0 %v2243
    %v2768 = vpop.f32.mrf.mxu0
    %v2769 = vadd.f32 %v2756, %v2768
    %v2770 = vpop.f32.mrf.mxu0
    %2771 = vdwg.mxu0
    %2772 = vmatpush.bf16.msra.mxu0 %v2603
    %2773 = vmatpush.bf16.msra.mxu0 %v2601
    %2774 = vmatpush.bf16.msra.mxu0 %v2599
    %2775 = vmatpush.bf16.msra.mxu0 %v2597
    %2776 = vmatpush.bf16.msra.mxu0 %v2595
    %2777 = vmatpush.bf16.msra.mxu0 %v2593
    %2778 = vmatpush.bf16.msra.mxu0 %v2591
    %2779 = vmatpush.bf16.msra.mxu0 %v2589
    %2780 = vmatmul.bf16.gmra.mxu0 %v2244
    %v2781 = vpop.f32.mrf.mxu0
    %v2782 = vadd.f32 %v2769, %v2781
    %v2783 = vpop.f32.mrf.mxu0
    %2784 = vdwg.mxu0
    %2785 = vmatpush.bf16.msra.mxu0 %v2619
    %2786 = vmatpush.bf16.msra.mxu0 %v2617
    %2787 = vmatpush.bf16.msra.mxu0 %v2615
    %2788 = vmatpush.bf16.msra.mxu0 %v2613
    %2789 = vmatpush.bf16.msra.mxu0 %v2611
    %2790 = vmatpush.bf16.msra.mxu0 %v2609
    %2791 = vmatpush.bf16.msra.mxu0 %v2607
    %2792 = vmatpush.bf16.msra.mxu0 %v2605
    %2793 = vmatmul.bf16.gmra.mxu0 %v2245
    %v2794 = vpop.f32.mrf.mxu0
    %v2795 = vadd.f32 %v2782, %v2794
    %v2796 = vpop.f32.mrf.mxu0
    %2797 = vdwg.mxu0
    %2798 = vmatpush.bf16.msra.mxu0 %v2635
    %2799 = vmatpush.bf16.msra.mxu0 %v2633
    %2800 = vmatpush.bf16.msra.mxu0 %v2631
    %2801 = vmatpush.bf16.msra.mxu0 %v2629
    %2802 = vmatpush.bf16.msra.mxu0 %v2627
    %2803 = vmatpush.bf16.msra.mxu0 %v2625
    %2804 = vmatpush.bf16.msra.mxu0 %v2623
    %2805 = vmatpush.bf16.msra.mxu0 %v2621
    %2806 = vmatmul.bf16.gmra.mxu0 %v2246
    %v2807 = vpop.f32.mrf.mxu0
    %v2808 = vadd.f32 %v2795, %v2807
    %v2809 = vpop.f32.mrf.mxu0
    %2810 = vdwg.mxu0
    %2811 = vmatpush.bf16.msra.mxu0 %v2556
    %2812 = vmatpush.bf16.msra.mxu0 %v2554
    %2813 = vmatpush.bf16.msra.mxu0 %v2552
    %2814 = vmatpush.bf16.msra.mxu0 %v2550
    %2815 = vmatpush.bf16.msra.mxu0 %v2548
    %2816 = vmatpush.bf16.msra.mxu0 %v2546
    %2817 = vmatpush.bf16.msra.mxu0 %v2544
    %2818 = vmatpush.bf16.msra.mxu0 %v2542
    %2819 = vmatmul.bf16.gmra.mxu0 %v2241
    %v2820 = vpop.f32.mrf.mxu0
    %v2821 = vadd.f32 0.0, %v2820
    %v2822 = vpop.f32.mrf.mxu0
    %2823 = vdwg.mxu0
    %2824 = vmatpush.bf16.msra.mxu0 %v2572
    %2825 = vmatpush.bf16.msra.mxu0 %v2570
    %2826 = vmatpush.bf16.msra.mxu0 %v2568
    %2827 = vmatpush.bf16.msra.mxu0 %v2566
    %2828 = vmatpush.bf16.msra.mxu0 %v2564
    %2829 = vmatpush.bf16.msra.mxu0 %v2562
    %2830 = vmatpush.bf16.msra.mxu0 %v2560
    %2831 = vmatpush.bf16.msra.mxu0 %v2558
    %2832 = vmatmul.bf16.gmra.mxu0 %v2242
    %v2833 = vpop.f32.mrf.mxu0
    %v2834 = vadd.f32 %v2821, %v2833
    %v2835 = vpop.f32.mrf.mxu0
    %2836 = vdwg.mxu0
    %2837 = vmatpush.bf16.msra.mxu0 %v2588
    %2838 = vmatpush.bf16.msra.mxu0 %v2586
    %2839 = vmatpush.bf16.msra.mxu0 %v2584
    %2840 = vmatpush.bf16.msra.mxu0 %v2582
    %2841 = vmatpush.bf16.msra.mxu0 %v2580
    %2842 = vmatpush.bf16.msra.mxu0 %v2578
    %2843 = vmatpush.bf16.msra.mxu0 %v2576
    %2844 = vmatpush.bf16.msra.mxu0 %v2574
    %2845 = vmatmul.bf16.gmra.mxu0 %v2243
    %v2846 = vpop.f32.mrf.mxu0
    %v2847 = vadd.f32 %v2834, %v2846
    %v2848 = vpop.f32.mrf.mxu0
    %2849 = vdwg.mxu0
    %2850 = vmatpush.bf16.msra.mxu0 %v2604
    %2851 = vmatpush.bf16.msra.mxu0 %v2602
    %2852 = vmatpush.bf16.msra.mxu0 %v2600
    %2853 = vmatpush.bf16.msra.mxu0 %v2598
    %2854 = vmatpush.bf16.msra.mxu0 %v2596
    %2855 = vmatpush.bf16.msra.mxu0 %v2594
    %2856 = vmatpush.bf16.msra.mxu0 %v2592
    %2857 = vmatpush.bf16.msra.mxu0 %v2590
    %2858 = vmatmul.bf16.gmra.mxu0 %v2244
    %v2859 = vpop.f32.mrf.mxu0
    %v2860 = vadd.f32 %v2847, %v2859
    %v2861 = vpop.f32.mrf.mxu0
    %2862 = vdwg.mxu0
    %2863 = vmatpush.bf16.msra.mxu0 %v2620
    %2864 = vmatpush.bf16.msra.mxu0 %v2618
    %2865 = vmatpush.bf16.msra.mxu0 %v2616
    %2866 = vmatpush.bf16.msra.mxu0 %v2614
    %2867 = vmatpush.bf16.msra.mxu0 %v2612
    %2868 = vmatpush.bf16.msra.mxu0 %v2610
    %2869 = vmatpush.bf16.msra.mxu0 %v2608
    %2870 = vmatpush.bf16.msra.mxu0 %v2606
    %2871 = vmatmul.bf16.gmra.mxu0 %v2245
    %v2872 = vpop.f32.mrf.mxu0
    %v2873 = vadd.f32 %v2860, %v2872
    %v2874 = vpop.f32.mrf.mxu0
    %2875 = vdwg.mxu0
    %2876 = vmatpush.bf16.msra.mxu0 %v2636
    %2877 = vmatpush.bf16.msra.mxu0 %v2634
    %2878 = vmatpush.bf16.msra.mxu0 %v2632
    %2879 = vmatpush.bf16.msra.mxu0 %v2630
    %2880 = vmatpush.bf16.msra.mxu0 %v2628
    %2881 = vmatpush.bf16.msra.mxu0 %v2626
    %2882 = vmatpush.bf16.msra.mxu0 %v2624
    %2883 = vmatpush.bf16.msra.mxu0 %v2622
    %2884 = vmatmul.bf16.gmra.mxu0 %v2246
    %v2885 = vpop.f32.mrf.mxu0
    %v2886 = vadd.f32 %v2873, %v2885
    %v2887 = vpop.f32.mrf.mxu0
    %2888 = vdwg.mxu0
    %v2889 = vld [vmem:[#allocation10] sm:$0xf]
    %v2891 = vperm.slane %v2889, 0
    %v2892 = vperm.slane %v2889, 1
    %v2893 = vperm.slane %v2889, 2
    %v2894 = vperm.slane %v2889, 3
    %v2899 = vadd.f32 %v1931, %v2891
    %v2900 = vadd.f32 %v2139, %v2892
    %v2901 = vadd.f32 %v2808, %v2893
    %v2902 = vadd.f32 %v2886, %v2894
    %v2903 = vpack.c.bf16 %v2899, %v2899
    %v2904 = vpack.c.bf16 %v2900, %v2900
    %v2905 = vpack.c.bf16 %v2901, %v2901
    %v2906 = vpack.c.bf16 %v2902, %v2902
    %v2907 = vld [vmem:[#allocation11] sm:$0xf]
    %v2908 = vld [vmem:[#allocation11 + $0x4] sm:$0xf]
    %v2909 = vld [vmem:[#allocation11 + $0x8] sm:$0xf]
    %v2910 = vld [vmem:[#allocation11 + $0xc] sm:$0xf]
    %v2911 = vld [vmem:[#allocation11 + $0x10] sm:$0xf]
    %v2912 = vld [vmem:[#allocation11 + $0x14] sm:$0xf]
    %v2913 = vld [vmem:[#allocation11 + $0x18] sm:$0xf]
    %v2914 = vld [vmem:[#allocation11 + $0x1c] sm:$0xf]
    %v2915 = vld [vmem:[#allocation11 + $0x20] sm:$0xf]
    %v2916 = vld [vmem:[#allocation11 + $0x24] sm:$0xf]
    %v2917 = vld [vmem:[#allocation11 + $0x28] sm:$0xf]
    %v2918 = vld [vmem:[#allocation11 + $0x2c] sm:$0xf]
    %v2919 = vld [vmem:[#allocation11 + $0x30] sm:$0xf]
    %v2920 = vld [vmem:[#allocation11 + $0x34] sm:$0xf]
    %v2921 = vld [vmem:[#allocation11 + $0x38] sm:$0xf]
    %v2922 = vld [vmem:[#allocation11 + $0x3c] sm:$0xf]
    %v2923 = vld [vmem:[#allocation11 + $0x40] sm:$0xf]
    %v2924 = vld [vmem:[#allocation11 + $0x44] sm:$0xf]
    %v2925 = vld [vmem:[#allocation11 + $0x48] sm:$0xf]
    %v2926 = vld [vmem:[#allocation11 + $0x4c] sm:$0xf]
    %v2927 = vld [vmem:[#allocation11 + $0x50] sm:$0xf]
    %v2928 = vld [vmem:[#allocation11 + $0x54] sm:$0xf]
    %v2929 = vld [vmem:[#allocation11 + $0x58] sm:$0xf]
    %v2930 = vld [vmem:[#allocation11 + $0x5c] sm:$0xf]
    %v2931 = vld [vmem:[#allocation11 + $0x60] sm:$0xf]
    %v2932 = vld [vmem:[#allocation11 + $0x64] sm:$0xf]
    %v2933 = vld [vmem:[#allocation11 + $0x68] sm:$0xf]
    %v2934 = vld [vmem:[#allocation11 + $0x6c] sm:$0xf]
    %v2935 = vld [vmem:[#allocation11 + $0x70] sm:$0xf]
    %v2936 = vld [vmem:[#allocation11 + $0x74] sm:$0xf]
    %v2937 = vld [vmem:[#allocation11 + $0x78] sm:$0xf]
    %v2938 = vld [vmem:[#allocation11 + $0x7c] sm:$0xf]
    %v2939 = vld [vmem:[#allocation11 + $0x80] sm:$0xf]
    %v2940 = vld [vmem:[#allocation11 + $0x84] sm:$0xf]
    %v2941 = vld [vmem:[#allocation11 + $0x88] sm:$0xf]
    %v2942 = vld [vmem:[#allocation11 + $0x8c] sm:$0xf]
    %v2943 = vld [vmem:[#allocation11 + $0x90] sm:$0xf]
    %v2944 = vld [vmem:[#allocation11 + $0x94] sm:$0xf]
    %v2945 = vld [vmem:[#allocation11 + $0x98] sm:$0xf]
    %v2946 = vld [vmem:[#allocation11 + $0x9c] sm:$0xf]
    %v2947 = vld [vmem:[#allocation11 + $0xa0] sm:$0xf]
    %v2948 = vld [vmem:[#allocation11 + $0xa4] sm:$0xf]
    %v2949 = vld [vmem:[#allocation11 + $0xa8] sm:$0xf]
    %v2950 = vld [vmem:[#allocation11 + $0xac] sm:$0xf]
    %v2951 = vld [vmem:[#allocation11 + $0xb0] sm:$0xf]
    %v2952 = vld [vmem:[#allocation11 + $0xb4] sm:$0xf]
    %v2953 = vld [vmem:[#allocation11 + $0xb8] sm:$0xf]
    %v2954 = vld [vmem:[#allocation11 + $0xbc] sm:$0xf]
    %v2955 = vld [vmem:[#allocation11 + $0xc0] sm:$0xf]
    %v2956 = vld [vmem:[#allocation11 + $0xc4] sm:$0xf]
    %v2957 = vld [vmem:[#allocation11 + $0xc8] sm:$0xf]
    %v2958 = vld [vmem:[#allocation11 + $0xcc] sm:$0xf]
    %v2959 = vld [vmem:[#allocation11 + $0xd0] sm:$0xf]
    %v2960 = vld [vmem:[#allocation11 + $0xd4] sm:$0xf]
    %v2961 = vld [vmem:[#allocation11 + $0xd8] sm:$0xf]
    %v2962 = vld [vmem:[#allocation11 + $0xdc] sm:$0xf]
    %v2963 = vld [vmem:[#allocation11 + $0xe0] sm:$0xf]
    %v2964 = vld [vmem:[#allocation11 + $0xe4] sm:$0xf]
    %v2965 = vld [vmem:[#allocation11 + $0xe8] sm:$0xf]
    %v2966 = vld [vmem:[#allocation11 + $0xec] sm:$0xf]
    %v2967 = vld [vmem:[#allocation11 + $0xf0] sm:$0xf]
    %v2968 = vld [vmem:[#allocation11 + $0xf4] sm:$0xf]
    %v2969 = vld [vmem:[#allocation11 + $0xf8] sm:$0xf]
    %v2970 = vld [vmem:[#allocation11 + $0xfc] sm:$0xf]
    %v2971 = vld [vmem:[%s6] sm:$0x1]
    %v2973 = vperm.slane %v2971, 0
    %v3039 = vunpack.c.l.b16 %v2907
    %v3040 = vunpack.c.l.b16 %v2908
    %v3041 = vunpack.c.l.b16 %v2909
    %v3042 = vunpack.c.l.b16 %v2910
    %v3043 = vunpack.c.l.b16 %v2911
    %v3044 = vunpack.c.l.b16 %v2912
    %v3045 = vunpack.c.l.b16 %v2913
    %v3046 = vunpack.c.l.b16 %v2914
    %v3047 = vunpack.c.l.b16 %v2915
    %v3048 = vunpack.c.l.b16 %v2916
    %v3049 = vunpack.c.l.b16 %v2917
    %v3050 = vunpack.c.l.b16 %v2918
    %v3051 = vunpack.c.l.b16 %v2919
    %v3052 = vunpack.c.l.b16 %v2920
    %v3053 = vunpack.c.l.b16 %v2921
    %v3054 = vunpack.c.l.b16 %v2922
    %v3055 = vunpack.c.l.b16 %v2923
    %v3056 = vunpack.c.l.b16 %v2924
    %v3057 = vunpack.c.l.b16 %v2925
    %v3058 = vunpack.c.l.b16 %v2926
    %v3059 = vunpack.c.l.b16 %v2927
    %v3060 = vunpack.c.l.b16 %v2928
    %v3061 = vunpack.c.l.b16 %v2929
    %v3062 = vunpack.c.l.b16 %v2930
    %v3063 = vunpack.c.l.b16 %v2931
    %v3064 = vunpack.c.l.b16 %v2932
    %v3065 = vunpack.c.l.b16 %v2933
    %v3066 = vunpack.c.l.b16 %v2934
    %v3067 = vunpack.c.l.b16 %v2935
    %v3068 = vunpack.c.l.b16 %v2936
    %v3069 = vunpack.c.l.b16 %v2937
    %v3070 = vunpack.c.l.b16 %v2938
    %v3071 = vunpack.c.l.b16 %v2939
    %v3072 = vunpack.c.l.b16 %v2940
    %v3073 = vunpack.c.l.b16 %v2941
    %v3074 = vunpack.c.l.b16 %v2942
    %v3075 = vunpack.c.l.b16 %v2943
    %v3076 = vunpack.c.l.b16 %v2944
    %v3077 = vunpack.c.l.b16 %v2945
    %v3078 = vunpack.c.l.b16 %v2946
    %v3079 = vunpack.c.l.b16 %v2947
    %v3080 = vunpack.c.l.b16 %v2948
    %v3081 = vunpack.c.l.b16 %v2949
    %v3082 = vunpack.c.l.b16 %v2950
    %v3083 = vunpack.c.l.b16 %v2951
    %v3084 = vunpack.c.l.b16 %v2952
    %v3085 = vunpack.c.l.b16 %v2953
    %v3086 = vunpack.c.l.b16 %v2954
    %v3087 = vunpack.c.l.b16 %v2955
    %v3088 = vunpack.c.l.b16 %v2956
    %v3089 = vunpack.c.l.b16 %v2957
    %v3090 = vunpack.c.l.b16 %v2958
    %v3091 = vunpack.c.l.b16 %v2959
    %v3092 = vunpack.c.l.b16 %v2960
    %v3093 = vunpack.c.l.b16 %v2961
    %v3094 = vunpack.c.l.b16 %v2962
    %v3095 = vunpack.c.l.b16 %v2963
    %v3096 = vunpack.c.l.b16 %v2964
    %v3097 = vunpack.c.l.b16 %v2965
    %v3098 = vunpack.c.l.b16 %v2966
    %v3099 = vunpack.c.l.b16 %v2967
    %v3100 = vunpack.c.l.b16 %v2968
    %v3101 = vunpack.c.l.b16 %v2969
    %v3102 = vunpack.c.l.b16 %v2970
    %v3103 = vpack.c.b16 %v3040, %v3039
    %v3104 = vpack.c.b16 %v3042, %v3041
    %v3105 = vpack.c.b16 %v3044, %v3043
    %v3106 = vpack.c.b16 %v3046, %v3045
    %v3107 = vpack.c.b16 %v3048, %v3047
    %v3108 = vpack.c.b16 %v3050, %v3049
    %v3109 = vpack.c.b16 %v3052, %v3051
    %v3110 = vpack.c.b16 %v3054, %v3053
    %v3111 = vpack.c.b16 %v3056, %v3055
    %v3112 = vpack.c.b16 %v3058, %v3057
    %v3113 = vpack.c.b16 %v3060, %v3059
    %v3114 = vpack.c.b16 %v3062, %v3061
    %v3115 = vpack.c.b16 %v3064, %v3063
    %v3116 = vpack.c.b16 %v3066, %v3065
    %v3117 = vpack.c.b16 %v3068, %v3067
    %v3118 = vpack.c.b16 %v3070, %v3069
    %v3119 = vpack.c.b16 %v3072, %v3071
    %v3120 = vpack.c.b16 %v3074, %v3073
    %v3121 = vpack.c.b16 %v3076, %v3075
    %v3122 = vpack.c.b16 %v3078, %v3077
    %v3123 = vpack.c.b16 %v3080, %v3079
    %v3124 = vpack.c.b16 %v3082, %v3081
    %v3125 = vpack.c.b16 %v3084, %v3083
    %v3126 = vpack.c.b16 %v3086, %v3085
    %v3127 = vpack.c.b16 %v3088, %v3087
    %v3128 = vpack.c.b16 %v3090, %v3089
    %v3129 = vpack.c.b16 %v3092, %v3091
    %v3130 = vpack.c.b16 %v3094, %v3093
    %v3131 = vpack.c.b16 %v3096, %v3095
    %v3132 = vpack.c.b16 %v3098, %v3097
    %v3133 = vpack.c.b16 %v3100, %v3099
    %v3134 = vpack.c.b16 %v3102, %v3101
    %3167 = vmatpush.bf16.msra.mxu0 %v3110
    %3168 = vmatpush.bf16.msra.mxu0 %v3109
    %3169 = vmatpush.bf16.msra.mxu0 %v3108
    %3170 = vmatpush.bf16.msra.mxu0 %v3107
    %3171 = vmatpush.bf16.msra.mxu0 %v3106
    %3172 = vmatpush.bf16.msra.mxu0 %v3105
    %3173 = vmatpush.bf16.msra.mxu0 %v3104
    %3174 = vmatpush.bf16.msra.mxu0 %v3103
    %3175 = vmatmul.bf16.gmra.mxu0 %v2903
    %v3176 = vpop.f32.mrf.mxu0
    %v3177 = vadd.f32 %v2973, %v3176
    %v3178 = vpop.f32.mrf.mxu0
    %3179 = vdwg.mxu0
    %3180 = vmatpush.bf16.msra.mxu0 %v3118
    %3181 = vmatpush.bf16.msra.mxu0 %v3117
    %3182 = vmatpush.bf16.msra.mxu0 %v3116
    %3183 = vmatpush.bf16.msra.mxu0 %v3115
    %3184 = vmatpush.bf16.msra.mxu0 %v3114
    %3185 = vmatpush.bf16.msra.mxu0 %v3113
    %3186 = vmatpush.bf16.msra.mxu0 %v3112
    %3187 = vmatpush.bf16.msra.mxu0 %v3111
    %3188 = vmatmul.bf16.gmra.mxu0 %v2904
    %v3189 = vpop.f32.mrf.mxu0
    %v3190 = vadd.f32 %v3177, %v3189
    %v3191 = vpop.f32.mrf.mxu0
    %3192 = vdwg.mxu0
    %3193 = vmatpush.bf16.msra.mxu0 %v3126
    %3194 = vmatpush.bf16.msra.mxu0 %v3125
    %3195 = vmatpush.bf16.msra.mxu0 %v3124
    %3196 = vmatpush.bf16.msra.mxu0 %v3123
    %3197 = vmatpush.bf16.msra.mxu0 %v3122
    %3198 = vmatpush.bf16.msra.mxu0 %v3121
    %3199 = vmatpush.bf16.msra.mxu0 %v3120
    %3200 = vmatpush.bf16.msra.mxu0 %v3119
    %3201 = vmatmul.bf16.gmra.mxu0 %v2905
    %v3202 = vpop.f32.mrf.mxu0
    %v3203 = vadd.f32 %v3190, %v3202
    %v3204 = vpop.f32.mrf.mxu0
    %3205 = vdwg.mxu0
    %3206 = vmatpush.bf16.msra.mxu0 %v3134
    %3207 = vmatpush.bf16.msra.mxu0 %v3133
    %3208 = vmatpush.bf16.msra.mxu0 %v3132
    %3209 = vmatpush.bf16.msra.mxu0 %v3131
    %3210 = vmatpush.bf16.msra.mxu0 %v3130
    %3211 = vmatpush.bf16.msra.mxu0 %v3129
    %3212 = vmatpush.bf16.msra.mxu0 %v3128
    %3213 = vmatpush.bf16.msra.mxu0 %v3127
    %3214 = vmatmul.bf16.gmra.mxu0 %v2906
    %v3215 = vpop.f32.mrf.mxu0
    %v3216 = vadd.f32 %v3203, %v3215
    %v3217 = vpop.f32.mrf.mxu0
    %3218 = vdwg.mxu0
    %v3219 = vlaneseq
    %v3220 = vand.u32 %v3219, 127
    %vm3221 = vcmp.ge.s32.totalorder %v3220, 0
    %vm3222 = vcmp.lt.s32.totalorder %v3220, 8
    %vm3223 = vmand %vm3221, %vm3222
    %v3224 = vsel %vm3223, %v3216, -1e+30
    %vm3225 = vcmask 1041408
    %v3226 = vsel %vm3225, %v3224, -inf
    %3227 = vmax.xlane.f32.xlu0 %v3226
    %v3228 = vpop.xlane.xlu0 %3227
    %v3229 = vsub.f32 %v3224, %v3228
    %v3230 = vmul.f32 %v3229, 1.442695
    %v3231 = vpow.pop %v3230
    %v3232 = vsel %vm3225, %v3231, 0.0
    %3233 = vadd.xlane.f32.xlu0 %v3232
    %v3234 = vpop.xlane.xlu0 %3233
    %v3235 = vrcp.pop %v3234
    %v3236 = vmul.f32 %v3231, %v3235
    %v3237 = vpack.c.bf16 %v3236, %v3236
    %v3238 = vld [vmem:[#allocation13] sm:$0xf]
    %v3239 = vld [vmem:[#allocation13 + $0x4] sm:$0xf]
    %v3240 = vld [vmem:[#allocation13 + $0x8] sm:$0xf]
    %v3241 = vld [vmem:[#allocation13 + $0xc] sm:$0xf]
    %v3242 = vld [vmem:[#allocation13 + $0x10] sm:$0xf]
    %v3243 = vld [vmem:[#allocation13 + $0x14] sm:$0xf]
    %v3244 = vld [vmem:[#allocation13 + $0x18] sm:$0xf]
    %v3245 = vld [vmem:[#allocation13 + $0x1c] sm:$0xf]
    %v3246 = vld [vmem:[#allocation13 + $0x20] sm:$0xf]
    %v3247 = vld [vmem:[#allocation13 + $0x24] sm:$0xf]
    %v3248 = vld [vmem:[#allocation13 + $0x28] sm:$0xf]
    %v3249 = vld [vmem:[#allocation13 + $0x2c] sm:$0xf]
    %v3250 = vld [vmem:[#allocation13 + $0x30] sm:$0xf]
    %v3251 = vld [vmem:[#allocation13 + $0x34] sm:$0xf]
    %v3252 = vld [vmem:[#allocation13 + $0x38] sm:$0xf]
    %v3253 = vld [vmem:[#allocation13 + $0x3c] sm:$0xf]
    %v3270 = vunpack.c.l.b16 %v3238
    %v3271 = vunpack.c.l.b16 %v3239
    %v3272 = vunpack.c.l.b16 %v3240
    %v3273 = vunpack.c.l.b16 %v3241
    %v3274 = vunpack.c.l.b16 %v3242
    %v3275 = vunpack.c.l.b16 %v3243
    %v3276 = vunpack.c.l.b16 %v3244
    %v3277 = vunpack.c.l.b16 %v3245
    %v3278 = vunpack.c.l.b16 %v3246
    %v3279 = vunpack.c.l.b16 %v3247
    %v3280 = vunpack.c.l.b16 %v3248
    %v3281 = vunpack.c.l.b16 %v3249
    %v3282 = vunpack.c.l.b16 %v3250
    %v3283 = vunpack.c.l.b16 %v3251
    %v3284 = vunpack.c.l.b16 %v3252
    %v3285 = vunpack.c.l.b16 %v3253
    %v3286 = vpack.c.b16 %v3271, %v3270
    %v3287 = vpack.c.b16 %v3273, %v3272
    %v3288 = vpack.c.b16 %v3275, %v3274
    %v3289 = vpack.c.b16 %v3277, %v3276
    %v3290 = vpack.c.b16 %v3279, %v3278
    %v3291 = vpack.c.b16 %v3281, %v3280
    %v3292 = vpack.c.b16 %v3283, %v3282
    %v3293 = vpack.c.b16 %v3285, %v3284
    %3302 = vmatpush.bf16.msra.mxu0 %v3293
    %3303 = vmatpush.bf16.msra.mxu0 %v3292
    %3304 = vmatpush.bf16.msra.mxu0 %v3291
    %3305 = vmatpush.bf16.msra.mxu0 %v3290
    %3306 = vmatpush.bf16.msra.mxu0 %v3289
    %3307 = vmatpush.bf16.msra.mxu0 %v3288
    %3308 = vmatpush.bf16.msra.mxu0 %v3287
    %3309 = vmatpush.bf16.msra.mxu0 %v3286
    %3310 = vmatmul.bf16.gmra.mxu0 %v3237
    %v3311 = vpop.f32.mrf.mxu0
    %v3312 = vadd.f32 0.0, %v3311
    %v3313 = vpop.f32.mrf.mxu0
    %3314 = vdwg.mxu0
    %v3315 = vadd.f32 %v3216, %v3312
    %vm3316 = vcmp.ge.s32.totalorder %v3220, 8
    %vm3317 = vcmp.lt.s32.totalorder %v3220, 24
    %vm3318 = vmand %vm3316, %vm3317
    %v3319 = vsel %vm3318, %v3315, -1e+30
    %v3320 = vsel %vm3225, %v3319, -inf
    %3321 = vmax.xlane.f32.xlu0 %v3320
    %v3322 = vpop.xlane.xlu0 %3321
    %v3323 = vsub.f32 %v3319, %v3322
    %v3324 = vmul.f32 %v3323, 1.442695
    %v3325 = vpow.pop %v3324
    %v3326 = vsel %vm3225, %v3325, 0.0
    %3327 = vadd.xlane.f32.xlu0 %v3326
    %v3328 = vpop.xlane.xlu0 %3327
    %v3329 = vrcp.pop %v3328
    %v3330 = vmul.f32 %v3325, %v3329
    %v3331 = vpack.c.bf16 %v3330, %v3330
    %v3332 = vld [vmem:[#allocation14] sm:$0xf]
    %v3333 = vld [vmem:[#allocation14 + $0x4] sm:$0xf]
    %v3334 = vld [vmem:[#allocation14 + $0x8] sm:$0xf]
    %v3335 = vld [vmem:[#allocation14 + $0xc] sm:$0xf]
    %v3336 = vld [vmem:[#allocation14 + $0x10] sm:$0xf]
    %v3337 = vld [vmem:[#allocation14 + $0x14] sm:$0xf]
    %v3338 = vld [vmem:[#allocation14 + $0x18] sm:$0xf]
    %v3339 = vld [vmem:[#allocation14 + $0x1c] sm:$0xf]
    %v3340 = vld [vmem:[#allocation14 + $0x20] sm:$0xf]
    %v3341 = vld [vmem:[#allocation14 + $0x24] sm:$0xf]
    %v3342 = vld [vmem:[#allocation14 + $0x28] sm:$0xf]
    %v3343 = vld [vmem:[#allocation14 + $0x2c] sm:$0xf]
    %v3344 = vld [vmem:[#allocation14 + $0x30] sm:$0xf]
    %v3345 = vld [vmem:[#allocation14 + $0x34] sm:$0xf]
    %v3346 = vld [vmem:[#allocation14 + $0x38] sm:$0xf]
    %v3347 = vld [vmem:[#allocation14 + $0x3c] sm:$0xf]
    %v3364 = vunpack.c.l.b16 %v3332
    %v3365 = vunpack.c.l.b16 %v3333
    %v3366 = vunpack.c.l.b16 %v3334
    %v3367 = vunpack.c.l.b16 %v3335
    %v3368 = vunpack.c.l.b16 %v3336
    %v3369 = vunpack.c.l.b16 %v3337
    %v3370 = vunpack.c.l.b16 %v3338
    %v3371 = vunpack.c.l.b16 %v3339
    %v3372 = vunpack.c.l.b16 %v3340
    %v3373 = vunpack.c.l.b16 %v3341
    %v3374 = vunpack.c.l.b16 %v3342
    %v3375 = vunpack.c.l.b16 %v3343
    %v3376 = vunpack.c.l.b16 %v3344
    %v3377 = vunpack.c.l.b16 %v3345
    %v3378 = vunpack.c.l.b16 %v3346
    %v3379 = vunpack.c.l.b16 %v3347
    %v3380 = vpack.c.b16 %v3365, %v3364
    %v3381 = vpack.c.b16 %v3367, %v3366
    %v3382 = vpack.c.b16 %v3369, %v3368
    %v3383 = vpack.c.b16 %v3371, %v3370
    %v3384 = vpack.c.b16 %v3373, %v3372
    %v3385 = vpack.c.b16 %v3375, %v3374
    %v3386 = vpack.c.b16 %v3377, %v3376
    %v3387 = vpack.c.b16 %v3379, %v3378
    %3396 = vmatpush.bf16.msra.mxu0 %v3387
    %3397 = vmatpush.bf16.msra.mxu0 %v3386
    %3398 = vmatpush.bf16.msra.mxu0 %v3385
    %3399 = vmatpush.bf16.msra.mxu0 %v3384
    %3400 = vmatpush.bf16.msra.mxu0 %v3383
    %3401 = vmatpush.bf16.msra.mxu0 %v3382
    %3402 = vmatpush.bf16.msra.mxu0 %v3381
    %3403 = vmatpush.bf16.msra.mxu0 %v3380
    %3404 = vmatmul.bf16.gmra.mxu0 %v3331
    %v3405 = vpop.f32.mrf.mxu0
    %v3406 = vadd.f32 0.0, %v3405
    %v3407 = vpop.f32.mrf.mxu0
    %3408 = vdwg.mxu0
    %v3409 = vadd.f32 %v3315, %v3406
    %3410 = vst [vmem:[#allocation16] sm:$0x3] %v3409
    // Predicated region
    $region70: #{tpu_custom_call.1} parent=1 // pred_check
      _
    $region71: #{tpu_custom_call.1} parent=1 // pred_check_branch
      %3412 = sbr.rel (0) target = $region73
    $region72: #{tpu_custom_call.1} parent=1 // pred_region
      %3414 = vsyncadd [#allocation4], 0
      %s3416 = sshll.u32 [#allocation16], 4
      %s3417 = int_to_ptr.vmem [resolvable:$true] %s3416
      %s3418 = sshll.u32 %s9, 4
      %s3419 = int_to_ptr.hbm [resolvable:$true] %s3418
      %3421 = dma.vmem_to_hbm [thread:$0]  %s3417, 32, %s3419, [#allocation4]
    $region73: #{tpu_custom_call.1} parent=1 // pred_fallthru
      _
    // Predicated region
    $region74: #{tpu_custom_call.1} parent=1 // pred_check
      _
    $region75: #{tpu_custom_call.1} parent=1 // pred_check_branch
      %3423 = sbr.rel (0) target = $region77
    $region76: #{tpu_custom_call.1} parent=1 // pred_region
      %3425 = dma.done [#allocation4], 32
    $region77: #{tpu_custom_call.1} parent=1 // pred_fallthru
      _
    %3426 = vsyncpa [#allocation3], 1
    %3427 = vsyncpa [#allocation6], 1
    %3428 = vsyncpa [#allocation9], 1
    %3429 = vsyncpa [#allocation12], 1
    %3430 = vsyncpa [#allocation15], 1
    %3431 = vsyncpa [#allocation4], 1

</llo_original>
